<compile_context>
chip_gen: v7x
topology: tpu7x:2x2x1
jax: 0.10.0
libtpu: 0.0.40
codegen_flags: <defaults>
</compile_context>

<pallas_src>
import jax
import jax.numpy as jnp
from jax.experimental import pallas as pl
from jax.experimental.pallas import tpu as pltpu


# ----------------------------------------------------------------------------
# helpers
# ----------------------------------------------------------------------------
def _round_up(x, m):
    return ((x + m - 1) // m) * m


def _pad_to(a, shape):
    return jnp.pad(a, [(0, s - d) for d, s in zip(a.shape, shape)])


def compute_pc(tcn_channels, latent_channels):
    return _round_up(max(max(tcn_channels), max(latent_channels)), 128)


# ----------------------------------------------------------------------------
# Fused Pallas kernel: all latent layers + reparameterization in one call
# ----------------------------------------------------------------------------
def make_fused_kernel(L, nhl, PC, TN):
    """Kernel refs (in order):
        d, eps, w_in_d, w_in_z, b_in, [w_h, b_h], w12, b12,   (inputs)
        out,                                                  (packed mu|lv|z)
        z_scratch                                             (VMEM, carried)
    Weights are VMEM-resident (full-L blocks); indexed with the layer index.
    """

    def kernel(d_ref, eps_ref, wind_ref, winz_ref, bin_ref, *rest):
        if nhl > 0:
            wh_ref, bh_ref = rest[0], rest[1]
            rest = rest[2:]
        w12_ref, b12_ref, out_ref, z_scr = rest

        j = pl.program_id(1)       # layer step: j=0 is the top layer
        li = (L - 1) - j           # parameter / layer index for this step

        # Top layer has latent_dim_in = 0: start the z carry from zeros.
        @pl.when(j == 0)
        def _():
            z_scr[...] = jnp.zeros_like(z_scr)

        # enc_in + tanh: tanh(cat(d, z) @ w_in + b) == tanh(d@w_d + z@w_z + b)
        h = jnp.dot(d_ref[0], wind_ref[li], preferred_element_type=jnp.float32)
        h = h + jnp.dot(z_scr[...].astype(jnp.bfloat16), winz_ref[li],
                        preferred_element_type=jnp.float32)
        h = jnp.tanh(h + bin_ref[li])

        # hidden 1x1 convs + tanh (static unroll; nhl is a Python constant)
        for k in range(nhl):
            h = jnp.tanh(
                jnp.dot(h.astype(jnp.bfloat16), wh_ref[li * nhl + k],
                        preferred_element_type=jnp.float32)
                + bh_ref[li * nhl + k])

        # enc_out_1 / enc_out_2 fused into one lane-dense matmul.
        out12 = jnp.dot(h.astype(jnp.bfloat16), w12_ref[li],
                        preferred_element_type=jnp.float32) + b12_ref[li]
        mu = out12[:, :PC]
        lv = out12[:, PC:]

        # reparameterize: z = mu + eps * exp(0.5 * logvar)
        # eps is zero in padded channel lanes -> padded z lanes are exactly 0.
        z = mu + eps_ref[0] * jnp.exp(0.5 * lv)
        z_scr[...] = z  # carry to the next (lower-index) layer

        # Packed lane-dense output: [mu | logvar | z], each PC (=128k) wide.
        out_ref[0, :, 0:PC] = mu
        out_ref[0, :, PC:2 * PC] = lv
        out_ref[0, :, 2 * PC:3 * PC] = z

    return kernel


# ----------------------------------------------------------------------------
# Parameter packing: pad all channel dims to PC, stack layers, bf16 weights
# ----------------------------------------------------------------------------
def pack_params(params, tcn_channels, latent_channels, nhl, PC):
    L = len(params)
    W_in_d, W_in_z, B_in, W12, B12 = [], [], [], [], []
    W_h_flat, B_h_flat = [], []
    for i in range(L):
        p = params[i]
        c_d = tcn_channels[i]
        c_z = latent_channels[i + 1] if i < L - 1 else 0

        w_in = p["w_in"]                      # (c_d + c_z, hidden)
        W_in_d.append(_pad_to(w_in[:c_d], (PC, PC)))
        if c_z > 0:
            W_in_z.append(_pad_to(w_in[c_d:c_d + c_z], (PC, PC)))
        else:
            W_in_z.append(jnp.zeros((PC, PC), jnp.float32))
        B_in.append(_pad_to(p["b_in"], (1, PC)))

        for k in range(nhl):
            W_h_flat.append(_pad_to(p["w_h"][k], (PC, PC)))
            B_h_flat.append(_pad_to(p["b_h"][k], (1, PC)))

        # Fuse the two output projections along the output-channel axis.
        W12.append(jnp.concatenate(
            [_pad_to(p["w1"], (PC, PC)), _pad_to(p["w2"], (PC, PC))], axis=1))
        B12.append(jnp.concatenate(
            [_pad_to(p["b1"], (1, PC)), _pad_to(p["b2"], (1, PC))], axis=1))

    packed = dict(
        w_in_d=jnp.stack(W_in_d).astype(jnp.bfloat16),   # (L, PC, PC)
        w_in_z=jnp.stack(W_in_z).astype(jnp.bfloat16),   # (L, PC, PC)
        b_in=jnp.stack(B_in),                            # (L, 1, PC)   f32
        w12=jnp.stack(W12).astype(jnp.bfloat16),         # (L, PC, 2*PC)
        b12=jnp.stack(B12),                              # (L, 1, 2*PC) f32
    )
    if nhl > 0:
        packed["w_h"] = jnp.stack(W_h_flat).astype(jnp.bfloat16)  # (L*nhl, PC, PC)
        packed["b_h"] = jnp.stack(B_h_flat)                       # (L*nhl, 1, PC) f32
    return packed


# ----------------------------------------------------------------------------
# Fused forward pass (mirrors GenerativeModel.forward)
# ----------------------------------------------------------------------------
def generative_forward(packed, d_list, tcn_channels, latent_channels, nhl, key):
    L = len(d_list)
    B, _, T = d_list[0].shape
    N = B * T
    PC = packed["w_in_d"].shape[-1]

    # Row tiling: a single tile for small problems; for larger B*T use big
    # (<=1024-row) tiles and at least 2 tiles so both v7x TensorCores get work.
    if N <= 512:
        TN = _round_up(N, 8)
    else:
        TN = min(1024, _round_up((N + 1) // 2, 8))
    N_pad = _round_up(N, TN)
    n_row_tiles = N_pad // TN

    # NCT -> channel-last, zero-padded to PC, done ONCE per input tensor (bf16).
    d_stack = jnp.stack([
        _pad_to(jnp.transpose(d_list[i], (0, 2, 1)).reshape(N, tcn_channels[i]),
                (N_pad, PC))
        for i in range(L)
    ]).astype(jnp.bfloat16)                                 # (L, N_pad, PC)

    # eps ~ N(0,1) per layer, only for the real latent channels; padded lanes
    # (and padded rows) are zero so padded z lanes stay exactly zero.
    ekeys = jax.random.split(key, L)
    eps_stack = jnp.stack([
        _pad_to(jax.random.normal(ekeys[i], (N, latent_channels[i]), jnp.float32),
                (N_pad, PC))
        for i in range(L)
    ])                                                      # (L, N_pad, PC) f32

    data_map = lambda r, j: (L - 1 - j, r, 0)   # per-(row-tile, layer) blocks
    const_map = lambda r, j: (0, 0, 0)          # VMEM-resident weights (no re-DMA)

    in_specs = [
        pl.BlockSpec((1, TN, PC), data_map),                 # d
        pl.BlockSpec((1, TN, PC), data_map),                 # eps
        pl.BlockSpec((L, PC, PC), const_map),                # w_in_d  (resident)
        pl.BlockSpec((L, PC, PC), const_map),                # w_in_z  (resident)
        pl.BlockSpec((L, 1, PC), const_map),                 # b_in    (resident)
    ]
    inputs = [d_stack, eps_stack,
              packed["w_in_d"], packed["w_in_z"], packed["b_in"]]
    if nhl > 0:
        in_specs += [pl.BlockSpec((L * nhl, PC, PC), const_map),   # w_h
                     pl.BlockSpec((L * nhl, 1, PC), const_map)]    # b_h
        inputs += [packed["w_h"], packed["b_h"]]
    in_specs += [pl.BlockSpec((L, PC, 2 * PC), const_map),         # w12
                 pl.BlockSpec((L, 1, 2 * PC), const_map)]          # b12
    inputs += [packed["w12"], packed["b12"]]

    out_spec = pl.BlockSpec((1, TN, 3 * PC), data_map)
    out_shape = jax.ShapeDtypeStruct((L, N_pad, 3 * PC), jnp.float32)

    kernel = make_fused_kernel(L, nhl, PC, TN)
    out = pl.pallas_call(
        kernel,
        grid=(n_row_tiles, L),
        in_specs=in_specs,
        out_specs=out_spec,
        out_shape=out_shape,
        scratch_shapes=[pltpu.VMEM((TN, PC), jnp.float32)],
        compiler_params=pltpu.CompilerParams(
            dimension_semantics=("parallel", "arbitrary"),
            vmem_limit_bytes=32 * 1024 * 1024),
    )(*inputs)

    # Unpack: drop row padding, slice the REAL channels first, then transpose
    # the small (B, T, c) slabs back to NCT (8x less transpose traffic than
    # transposing the PC-padded slab).
    out = out[:, :N, :].reshape(L, B, T, 3 * PC)

    mu, logvar, z_by_layer = [], [], []
    for i in range(L):
        c = latent_channels[i]
        layer = out[i]                                   # (B, T, 3*PC)
        mu.append(jnp.transpose(layer[:, :, 0:c], (0, 2, 1)))
        logvar.append(jnp.transpose(layer[:, :, PC:PC + c], (0, 2, 1)))
        z_by_layer.append(jnp.transpose(layer[:, :, 2 * PC:2 * PC + c], (0, 2, 1)))

    # Match PyTorch ordering: z is [last layer, ..., first layer];
    # mu / logvar are [first layer, ..., last layer].
    z = [z_by_layer[i] for i in reversed(range(L))]
    return z, mu, logvar


# ----------------------------------------------------------------------------
# Deterministic parameter init (PyTorch Conv1d-style uniform bounds)
# ----------------------------------------------------------------------------
def conv1x1_init(key, c_in, c_out):
    kw, kb = jax.random.split(key)
    bound = 1.0 / (c_in ** 0.5)
    w = jax.random.uniform(kw, (c_in, c_out), jnp.float32, -bound, bound)
    b = jax.random.uniform(kb, (1, c_out), jnp.float32, -bound, bound)
    return w, b


def init_latent_layer(key, tcn_dim, latent_dim_in, latent_dim_out, hidden_dim, nhl):
    keys = jax.random.split(key, 3 + nhl)
    w_in, b_in = conv1x1_init(keys[0], tcn_dim + latent_dim_in, hidden_dim)
    w_h, b_h = [], []
    for i in range(nhl):
        w, b = conv1x1_init(keys[1 + i], hidden_dim, hidden_dim)
        w_h.append(w)
        b_h.append(b)
    w1, b1 = conv1x1_init(keys[1 + nhl], hidden_dim, latent_dim_out)
    w2, b2 = conv1x1_init(keys[2 + nhl], hidden_dim, latent_dim_out)
    return dict(w_in=w_in, b_in=b_in, w_h=w_h, b_h=b_h, w1=w1, b1=b1, w2=w2, b2=b2)


def init_generative_model(key, tcn_channels, latent_channels, nhl):
    L = len(tcn_channels)
    keys = jax.random.split(key, L)
    layers = []
    for i in range(L - 1):
        layers.append(init_latent_layer(
            keys[i], tcn_channels[i], latent_channels[i + 1],
            latent_channels[i], latent_channels[i], nhl))
    layers.append(init_latent_layer(
        keys[L - 1], tcn_channels[-1], 0, latent_channels[-1], latent_channels[-1], nhl))
    return layers


# ----------------------------------------------------------------------------
if __name__ == "__main__":
    key = jax.random.PRNGKey(0)
    B, T = 2, 16
    tcn_channels = [32, 16]
    latent_channels = [16, 8]
    num_hidden_layers = 2

    pkey, dkey, ekey = jax.random.split(key, 3)
    params = init_generative_model(pkey, tcn_channels, latent_channels, num_hidden_layers)
    PC = compute_pc(tcn_channels, latent_channels)
    packed = pack_params(params, tcn_channels, latent_channels, num_hidden_layers, PC)

    dkeys = jax.random.split(dkey, len(tcn_channels))
    # d[i]: (B, tcn_channels[i], T)  -- NCT, matching PyTorch Conv1d input layout
    d = [jax.random.normal(dkeys[i], (B, tcn_channels[i], T), jnp.float32)
         for i in range(len(tcn_channels))]

    z, mu, logvar = generative_forward(
        packed, d, tcn_channels, latent_channels, num_hidden_layers, key=ekey)
    jax.block_until_ready((z, mu, logvar))
    print("KERNEL_OK")
</pallas_src>

<mosaic_0001>
module attributes {stable_mosaic.version = 11 : i64} {
  func.func @kernel(%arg0: i32, %arg1: i32, %arg2: memref<1x32x128xbf16, #tpu.memory_space<vmem>>, %arg3: memref<1x32x128xf32, #tpu.memory_space<vmem>>, %arg4: memref<2x128x128xbf16, #tpu.memory_space<vmem>>, %arg5: memref<2x128x128xbf16, #tpu.memory_space<vmem>>, %arg6: memref<2x1x128xf32, #tpu.memory_space<vmem>>, %arg7: memref<4x128x128xbf16, #tpu.memory_space<vmem>>, %arg8: memref<4x1x128xf32, #tpu.memory_space<vmem>>, %arg9: memref<2x128x256xbf16, #tpu.memory_space<vmem>>, %arg10: memref<2x1x256xf32, #tpu.memory_space<vmem>>, %arg11: memref<1x32x384xf32, #tpu.memory_space<vmem>>, %arg12: memref<32x128xf32, #tpu.memory_space<vmem>>) attributes {dimension_semantics = [#tpu.dimension_semantics<parallel>, #tpu.dimension_semantics<arbitrary>], iteration_bounds = array<i64: 1, 2>, scalar_prefetch = 0 : i64, scratch_operands = 1 : i64, tpu.core_type = #tpu.core_type<tc>, window_params = [{transform_indices = @transform_0, window_bounds = array<i64: 1, 32, 128>}, {transform_indices = @transform_1, window_bounds = array<i64: 1, 32, 128>}, {pipeline_mode = #tpu.pipeline_mode<synchronous>, transform_indices = @transform_2, window_bounds = array<i64: 2, 128, 128>}, {pipeline_mode = #tpu.pipeline_mode<synchronous>, transform_indices = @transform_3, window_bounds = array<i64: 2, 128, 128>}, {pipeline_mode = #tpu.pipeline_mode<synchronous>, transform_indices = @transform_4, window_bounds = array<i64: 2, 1, 128>}, {pipeline_mode = #tpu.pipeline_mode<synchronous>, transform_indices = @transform_5, window_bounds = array<i64: 4, 128, 128>}, {pipeline_mode = #tpu.pipeline_mode<synchronous>, transform_indices = @transform_6, window_bounds = array<i64: 4, 1, 128>}, {pipeline_mode = #tpu.pipeline_mode<synchronous>, transform_indices = @transform_7, window_bounds = array<i64: 2, 128, 256>}, {pipeline_mode = #tpu.pipeline_mode<synchronous>, transform_indices = @transform_8, window_bounds = array<i64: 2, 1, 256>}, {transform_indices = @transform_9, window_bounds = array<i64: 1, 32, 384>}]} {
    %c1_i32 = arith.constant 1 : i32
    %0 = arith.subi %c1_i32, %arg1 : i32
    %c0_i32 = arith.constant 0 : i32
    %1 = arith.cmpi eq, %arg1, %c0_i32 : i32
    %2 = arith.extui %1 : i1 to i32
    %c0_i32_0 = arith.constant 0 : i32
    %3 = arith.cmpi ne, %2, %c0_i32_0 : i32
    scf.if %3 {
      %cst_47 = arith.constant 0.000000e+00 : f32
      %82 = vector.broadcast %cst_47 : f32 to vector<32x128xf32>
      %c0_48 = arith.constant 0 : index
      %c0_49 = arith.constant 0 : index
      %83 = vector.load %arg12[%c0_48, %c0_49] : memref<32x128xf32, #tpu.memory_space<vmem>>, vector<32x128xf32>
      tpu.vector_store %arg12[%c0_48, %c0_49], %82 {strides = array<i32>} : memref<32x128xf32, #tpu.memory_space<vmem>>, vector<32x128xf32>,
    } else {
    }
    %c0 = arith.constant 0 : index
    %c0_1 = arith.constant 0 : index
    %c0_2 = arith.constant 0 : index
    %4 = vector.load %arg2[%c0, %c0_1, %c0_2] : memref<1x32x128xbf16, #tpu.memory_space<vmem>>, vector<1x32x128xbf16>
    %5 = vector.shape_cast %4 : vector<1x32x128xbf16> to vector<32x128xbf16>
    %6 = arith.index_cast %0 : i32 to index
    %c0_3 = arith.constant 0 : index
    %c0_4 = arith.constant 0 : index
    %7 = vector.load %arg4[%6, %c0_3, %c0_4] : memref<2x128x128xbf16, #tpu.memory_space<vmem>>, vector<1x128x128xbf16>
    %8 = vector.shape_cast %7 : vector<1x128x128xbf16> to vector<128x128xbf16>
    %cst = arith.constant dense<0.000000e+00> : vector<32x128xf32>
    %9 = tpu.matmul %5, %8, %cst {dimension_numbers = #tpu.dot_dimension_numbers<[1], [0], [0], [1], [0, 0, 1, 1], [], []>} : vector<32x128xbf16>, vector<128x128xbf16>, vector<32x128xf32> -> vector<32x128xf32>
    %c0_5 = arith.constant 0 : index
    %c0_6 = arith.constant 0 : index
    %10 = vector.load %arg12[%c0_5, %c0_6] : memref<32x128xf32, #tpu.memory_space<vmem>>, vector<32x128xf32>
    %11 = arith.truncf %10 : vector<32x128xf32> to vector<32x128xbf16>
    %12 = arith.index_cast %0 : i32 to index
    %c0_7 = arith.constant 0 : index
    %c0_8 = arith.constant 0 : index
    %13 = vector.load %arg5[%12, %c0_7, %c0_8] : memref<2x128x128xbf16, #tpu.memory_space<vmem>>, vector<1x128x128xbf16>
    %14 = vector.shape_cast %13 : vector<1x128x128xbf16> to vector<128x128xbf16>
    %cst_9 = arith.constant dense<0.000000e+00> : vector<32x128xf32>
    %15 = tpu.matmul %11, %14, %cst_9 {dimension_numbers = #tpu.dot_dimension_numbers<[1], [0], [0], [1], [0, 0, 1, 1], [], []>} : vector<32x128xbf16>, vector<128x128xbf16>, vector<32x128xf32> -> vector<32x128xf32>
    %16 = arith.addf %9, %15 : vector<32x128xf32>
    %17 = arith.index_cast %0 : i32 to index
    %c0_10 = arith.constant 0 : index
    %c0_11 = arith.constant 0 : index
    %18 = vector.load %arg6[%17, %c0_10, %c0_11] : memref<2x1x128xf32, #tpu.memory_space<vmem>>, vector<1x1x128xf32>
    %19 = vector.shape_cast %18 : vector<1x1x128xf32> to vector<1x128xf32>
    %20 = vector.broadcast %19 : vector<1x128xf32> to vector<32x128xf32>
    %21 = arith.addf %16, %20 : vector<32x128xf32>
    %22 = math.tanh %21 : vector<32x128xf32>
    %23 = arith.truncf %22 : vector<32x128xf32> to vector<32x128xbf16>
    %c2_i32 = arith.constant 2 : i32
    %24 = arith.muli %0, %c2_i32 : i32
    %c0_i32_12 = arith.constant 0 : i32
    %25 = arith.addi %24, %c0_i32_12 : i32
    %26 = arith.index_cast %25 : i32 to index
    %c0_13 = arith.constant 0 : index
    %c0_14 = arith.constant 0 : index
    %27 = vector.load %arg7[%26, %c0_13, %c0_14] : memref<4x128x128xbf16, #tpu.memory_space<vmem>>, vector<1x128x128xbf16>
    %28 = vector.shape_cast %27 : vector<1x128x128xbf16> to vector<128x128xbf16>
    %cst_15 = arith.constant dense<0.000000e+00> : vector<32x128xf32>
    %29 = tpu.matmul %23, %28, %cst_15 {dimension_numbers = #tpu.dot_dimension_numbers<[1], [0], [0], [1], [0, 0, 1, 1], [], []>} : vector<32x128xbf16>, vector<128x128xbf16>, vector<32x128xf32> -> vector<32x128xf32>
    %c2_i32_16 = arith.constant 2 : i32
    %30 = arith.muli %0, %c2_i32_16 : i32
    %c0_i32_17 = arith.constant 0 : i32
    %31 = arith.addi %30, %c0_i32_17 : i32
    %32 = arith.index_cast %31 : i32 to index
    %c0_18 = arith.constant 0 : index
    %c0_19 = arith.constant 0 : index
    %33 = vector.load %arg8[%32, %c0_18, %c0_19] : memref<4x1x128xf32, #tpu.memory_space<vmem>>, vector<1x1x128xf32>
    %34 = vector.shape_cast %33 : vector<1x1x128xf32> to vector<1x128xf32>
    %35 = vector.broadcast %34 : vector<1x128xf32> to vector<32x128xf32>
    %36 = arith.addf %29, %35 : vector<32x128xf32>
    %37 = math.tanh %36 : vector<32x128xf32>
    %38 = arith.truncf %37 : vector<32x128xf32> to vector<32x128xbf16>
    %c2_i32_20 = arith.constant 2 : i32
    %39 = arith.muli %0, %c2_i32_20 : i32
    %c1_i32_21 = arith.constant 1 : i32
    %40 = arith.addi %39, %c1_i32_21 : i32
    %41 = arith.index_cast %40 : i32 to index
    %c0_22 = arith.constant 0 : index
    %c0_23 = arith.constant 0 : index
    %42 = vector.load %arg7[%41, %c0_22, %c0_23] : memref<4x128x128xbf16, #tpu.memory_space<vmem>>, vector<1x128x128xbf16>
    %43 = vector.shape_cast %42 : vector<1x128x128xbf16> to vector<128x128xbf16>
    %cst_24 = arith.constant dense<0.000000e+00> : vector<32x128xf32>
    %44 = tpu.matmul %38, %43, %cst_24 {dimension_numbers = #tpu.dot_dimension_numbers<[1], [0], [0], [1], [0, 0, 1, 1], [], []>} : vector<32x128xbf16>, vector<128x128xbf16>, vector<32x128xf32> -> vector<32x128xf32>
    %c2_i32_25 = arith.constant 2 : i32
    %45 = arith.muli %0, %c2_i32_25 : i32
    %c1_i32_26 = arith.constant 1 : i32
    %46 = arith.addi %45, %c1_i32_26 : i32
    %47 = arith.index_cast %46 : i32 to index
    %c0_27 = arith.constant 0 : index
    %c0_28 = arith.constant 0 : index
    %48 = vector.load %arg8[%47, %c0_27, %c0_28] : memref<4x1x128xf32, #tpu.memory_space<vmem>>, vector<1x1x128xf32>
    %49 = vector.shape_cast %48 : vector<1x1x128xf32> to vector<1x128xf32>
    %50 = vector.broadcast %49 : vector<1x128xf32> to vector<32x128xf32>
    %51 = arith.addf %44, %50 : vector<32x128xf32>
    %52 = math.tanh %51 : vector<32x128xf32>
    %53 = arith.truncf %52 : vector<32x128xf32> to vector<32x128xbf16>
    %54 = arith.index_cast %0 : i32 to index
    %c0_29 = arith.constant 0 : index
    %c0_30 = arith.constant 0 : index
    %55 = vector.load %arg9[%54, %c0_29, %c0_30] : memref<2x128x256xbf16, #tpu.memory_space<vmem>>, vector<1x128x256xbf16>
    %56 = vector.shape_cast %55 : vector<1x128x256xbf16> to vector<128x256xbf16>
    %cst_31 = arith.constant dense<0.000000e+00> : vector<32x256xf32>
    %57 = tpu.matmul %53, %56, %cst_31 {dimension_numbers = #tpu.dot_dimension_numbers<[1], [0], [0], [1], [0, 0, 1, 1], [], []>} : vector<32x128xbf16>, vector<128x256xbf16>, vector<32x256xf32> -> vector<32x256xf32>
    %58 = arith.index_cast %0 : i32 to index
    %c0_32 = arith.constant 0 : index
    %c0_33 = arith.constant 0 : index
    %59 = vector.load %arg10[%58, %c0_32, %c0_33] : memref<2x1x256xf32, #tpu.memory_space<vmem>>, vector<1x1x256xf32>
    %60 = vector.shape_cast %59 : vector<1x1x256xf32> to vector<1x256xf32>
    %61 = vector.broadcast %60 : vector<1x256xf32> to vector<32x256xf32>
    %62 = arith.addf %57, %61 : vector<32x256xf32>
    %63 = vector.extract_strided_slice %62 {offsets = [0, 0], sizes = [32, 128], strides = [1, 1]} : vector<32x256xf32> to vector<32x128xf32>
    %64 = vector.extract_strided_slice %62 {offsets = [0, 128], sizes = [32, 128], strides = [1, 1]} : vector<32x256xf32> to vector<32x128xf32>
    %c0_34 = arith.constant 0 : index
    %c0_35 = arith.constant 0 : index
    %c0_36 = arith.constant 0 : index
    %65 = vector.load %arg3[%c0_34, %c0_35, %c0_36] : memref<1x32x128xf32, #tpu.memory_space<vmem>>, vector<1x32x128xf32>
    %66 = vector.shape_cast %65 : vector<1x32x128xf32> to vector<32x128xf32>
    %cst_37 = arith.constant 5.000000e-01 : f32
    %67 = vector.broadcast %cst_37 : f32 to vector<32x128xf32>
    %68 = arith.mulf %67, %64 : vector<32x128xf32>
    %69 = math.exp %68 : vector<32x128xf32>
    %70 = arith.mulf %66, %69 : vector<32x128xf32>
    %71 = arith.addf %63, %70 : vector<32x128xf32>
    %c0_38 = arith.constant 0 : index
    %c0_39 = arith.constant 0 : index
    %72 = vector.load %arg12[%c0_38, %c0_39] : memref<32x128xf32, #tpu.memory_space<vmem>>, vector<32x128xf32>
    tpu.vector_store %arg12[%c0_38, %c0_39], %71 {strides = array<i32>} : memref<32x128xf32, #tpu.memory_space<vmem>>, vector<32x128xf32>,
    %c0_40 = arith.constant 0 : index
    %c0_41 = arith.constant 0 : index
    %c0_42 = arith.constant 0 : index
    %73 = vector.load %arg11[%c0_40, %c0_41, %c0_42] : memref<1x32x384xf32, #tpu.memory_space<vmem>>, vector<1x32x128xf32>
    %74 = vector.shape_cast %73 : vector<1x32x128xf32> to vector<32x128xf32>
    %75 = vector.shape_cast %63 : vector<32x128xf32> to vector<1x32x128xf32>
    tpu.vector_store %arg11[%c0_40, %c0_41, %c0_42], %75 {strides = array<i32>} : memref<1x32x384xf32, #tpu.memory_space<vmem>>, vector<1x32x128xf32>,
    %c0_43 = arith.constant 0 : index
    %c0_44 = arith.constant 0 : index
    %c128 = arith.constant 128 : index
    %76 = vector.load %arg11[%c0_43, %c0_44, %c128] : memref<1x32x384xf32, #tpu.memory_space<vmem>>, vector<1x32x128xf32>
    %77 = vector.shape_cast %76 : vector<1x32x128xf32> to vector<32x128xf32>
    %78 = vector.shape_cast %64 : vector<32x128xf32> to vector<1x32x128xf32>
    tpu.vector_store %arg11[%c0_43, %c0_44, %c128], %78 {strides = array<i32>} : memref<1x32x384xf32, #tpu.memory_space<vmem>>, vector<1x32x128xf32>,
    %c0_45 = arith.constant 0 : index
    %c0_46 = arith.constant 0 : index
    %c256 = arith.constant 256 : index
    %79 = vector.load %arg11[%c0_45, %c0_46, %c256] : memref<1x32x384xf32, #tpu.memory_space<vmem>>, vector<1x32x128xf32>
    %80 = vector.shape_cast %79 : vector<1x32x128xf32> to vector<32x128xf32>
    %81 = vector.shape_cast %71 : vector<32x128xf32> to vector<1x32x128xf32>
    tpu.vector_store %arg11[%c0_45, %c0_46, %c256], %81 {strides = array<i32>} : memref<1x32x384xf32, #tpu.memory_space<vmem>>, vector<1x32x128xf32>,
    return
  }
  func.func @transform_0(%arg0: i32, %arg1: i32) -> (i32, i32, i32) {
    %c1_i32 = arith.constant 1 : i32
    %0 = arith.subi %c1_i32, %arg1 : i32
    %c0_i32 = arith.constant 0 : i32
    %c0_i32_0 = arith.constant 0 : i32
    return %0, %arg0, %c0_i32 : i32, i32, i32
  }
  func.func @transform_1(%arg0: i32, %arg1: i32) -> (i32, i32, i32) {
    %c1_i32 = arith.constant 1 : i32
    %0 = arith.subi %c1_i32, %arg1 : i32
    %c0_i32 = arith.constant 0 : i32
    %c0_i32_0 = arith.constant 0 : i32
    return %0, %arg0, %c0_i32 : i32, i32, i32
  }
  func.func @transform_2(%arg0: i32, %arg1: i32) -> (i32, i32, i32) {
    %c0_i32 = arith.constant 0 : i32
    %c0_i32_0 = arith.constant 0 : i32
    %c0_i32_1 = arith.constant 0 : i32
    %c0_i32_2 = arith.constant 0 : i32
    return %c0_i32, %c0_i32_0, %c0_i32_1 : i32, i32, i32
  }
  func.func @transform_3(%arg0: i32, %arg1: i32) -> (i32, i32, i32) {
    %c0_i32 = arith.constant 0 : i32
    %c0_i32_0 = arith.constant 0 : i32
    %c0_i32_1 = arith.constant 0 : i32
    %c0_i32_2 = arith.constant 0 : i32
    return %c0_i32, %c0_i32_0, %c0_i32_1 : i32, i32, i32
  }
  func.func @transform_4(%arg0: i32, %arg1: i32) -> (i32, i32, i32) {
    %c0_i32 = arith.constant 0 : i32
    %c0_i32_0 = arith.constant 0 : i32
    %c0_i32_1 = arith.constant 0 : i32
    %c0_i32_2 = arith.constant 0 : i32
    return %c0_i32, %c0_i32_0, %c0_i32_1 : i32, i32, i32
  }
  func.func @transform_5(%arg0: i32, %arg1: i32) -> (i32, i32, i32) {
    %c0_i32 = arith.constant 0 : i32
    %c0_i32_0 = arith.constant 0 : i32
    %c0_i32_1 = arith.constant 0 : i32
    %c0_i32_2 = arith.constant 0 : i32
    return %c0_i32, %c0_i32_0, %c0_i32_1 : i32, i32, i32
  }
  func.func @transform_6(%arg0: i32, %arg1: i32) -> (i32, i32, i32) {
    %c0_i32 = arith.constant 0 : i32
    %c0_i32_0 = arith.constant 0 : i32
    %c0_i32_1 = arith.constant 0 : i32
    %c0_i32_2 = arith.constant 0 : i32
    return %c0_i32, %c0_i32_0, %c0_i32_1 : i32, i32, i32
  }
  func.func @transform_7(%arg0: i32, %arg1: i32) -> (i32, i32, i32) {
    %c0_i32 = arith.constant 0 : i32
    %c0_i32_0 = arith.constant 0 : i32
    %c0_i32_1 = arith.constant 0 : i32
    %c0_i32_2 = arith.constant 0 : i32
    return %c0_i32, %c0_i32_0, %c0_i32_1 : i32, i32, i32
  }
  func.func @transform_8(%arg0: i32, %arg1: i32) -> (i32, i32, i32) {
    %c0_i32 = arith.constant 0 : i32
    %c0_i32_0 = arith.constant 0 : i32
    %c0_i32_1 = arith.constant 0 : i32
    %c0_i32_2 = arith.constant 0 : i32
    return %c0_i32, %c0_i32_0, %c0_i32_1 : i32, i32, i32
  }
  func.func @transform_9(%arg0: i32, %arg1: i32) -> (i32, i32, i32) {
    %c1_i32 = arith.constant 1 : i32
    %0 = arith.subi %c1_i32, %arg1 : i32
    %c0_i32 = arith.constant 0 : i32
    %c0_i32_0 = arith.constant 0 : i32
    return %0, %arg0, %c0_i32 : i32, i32, i32
  }
}

</mosaic_0001>

<llo_original>
// kernel: tpu_custom_call.1
$region0: #{tpu_custom_call.1}
  #allocation0 [shape = 'u32[]', space=smem, size = 0x4, offset = 0x4, fixed_abs, tag = 'smem constant byte address 0x4 - core index']
  #allocation1 [shape = 'u32[144,128]{1,0:T(1,128)}', space=vmem, size = 0x12000, scoped, tag = 'internal scratch']
  #allocation2 [shape = 'f32[32,128]{1,0:T(8,128)}', space=vmem, size = 0x4000, scoped, tag = 'scratch operand']
  %s0 = inlined_call_operand.hbm [shape: bf16[2,32,128], index: 0, kind: input, shape index: {}]
  %s1 = inlined_call_operand.hbm [shape: f32[2,32,128], index: 1, kind: input, shape index: {}]
  %s2 = inlined_call_operand.hbm [shape: bf16[2,128,128], index: 2, kind: input, shape index: {}]
  %s3 = inlined_call_operand.hbm [shape: bf16[2,128,128], index: 3, kind: input, shape index: {}]
  %s4 = inlined_call_operand.vmem [shape: f32[2,1,128], index: 4, kind: input, shape index: {}]
  %s5 = inlined_call_operand.hbm [shape: bf16[4,128,128], index: 5, kind: input, shape index: {}]
  %s6 = inlined_call_operand.vmem [shape: f32[4,1,128], index: 6, kind: input, shape index: {}]
  %s7 = inlined_call_operand.hbm [shape: bf16[2,128,256], index: 7, kind: input, shape index: {}]
  %s8 = inlined_call_operand.vmem [shape: f32[2,1,256], index: 8, kind: input, shape index: {}]
  %s9 = inlined_call_operand.hbm [shape: f32[2,32,384], index: 9, kind: output, shape index: {}]
  %s10 = sld [smem:[#allocation0]]
  $region97: #{tpu_custom_call.1} parent=0
    _
  %s12 = ssub.s32 1, %s10
  %s13 = scalar_select 0, %s12, %s10
  $region1: #{tpu_custom_call.1} parent=0
    #allocation3 [shape = 'u8[16384]{0}', space=vmem, size = 0x4000, scoped, tag = 'input window, operand 0']
    #allocation4 [shape = 's32[2]{0}', space=sflag, size = 0x8, scoped, tag = 'scoped memory for tpu_custom_call.1']
    #allocation5 [shape = 's32[2]{0}', space=sflag, size = 0x8, scoped, tag = 'scoped memory for tpu_custom_call.1']
    #allocation6 [shape = 'u8[32768]{0}', space=vmem, size = 0x8000, scoped, tag = 'input window, operand 1']
    #allocation7 [shape = 's32[2]{0}', space=sflag, size = 0x8, scoped, tag = 'scoped memory for tpu_custom_call.1']
    #allocation8 [shape = 'u8[65536]{0}', space=vmem, size = 0x10000, scoped, tag = 'input window, operand 2, single buffered']
    #allocation9 [shape = 'u8[65536]{0}', space=vmem, size = 0x10000, scoped, tag = 'input window, operand 3, single buffered']
    #allocation10 [shape = 's32[1]{0}', space=sflag, size = 0x4, scoped, tag = 'scoped memory for tpu_custom_call.1']
    #allocation11 [shape = 'u8[131072]{0}', space=vmem, size = 0x20000, scoped, tag = 'input window, operand 5, single buffered']
    #allocation12 [shape = 'u8[131072]{0}', space=vmem, size = 0x20000, scoped, tag = 'input window, operand 7, single buffered']
    #allocation13 [shape = 's32[1]{0}', space=sflag, size = 0x4, scoped, tag = 'scoped memory for tpu_custom_call.1']
    #allocation14 [shape = 'u8[98304]{0}', space=vmem, size = 0x18000, scoped, tag = 'output window, operand 0']
    %14 = vsyncpa [#allocation4], 0
    %s15 = scalar_lea.sflag [#allocation4], 1
    %16 = vsyncpa %s15, 0
    %17 = vsyncpa [#allocation7], 0
    %s18 = scalar_lea.sflag [#allocation7], 1
    %19 = vsyncpa %s18, 0
    %20 = vsyncpa [#allocation10], 0
    %21 = vsyncpa [#allocation13], 0
    %22 = vsyncpa [#allocation5], 0
    %s23 = scalar_lea.sflag [#allocation5], 1
    %24 = vsyncpa %s23, 0
    loop: start=0, step=1, limit=4
    $region2: #{tpu_custom_call.1} parent=1 // loop_pre_header
      _
    $region3: #{tpu_custom_call.1} parent=1 // loop_header
      %s26 = sphi 0, %s30
      %p27 = scmp.ge.s32.totalorder %s26, 4
      %s33 = sphi 0, %s45
      %s34 = sphi 0, %s41
      %s35 = sphi 0, %s33
      %s36 = sphi 0, %s34
      %s37 = sphi 0, %s35
      %s38 = sphi 0, %s36
      %s52 = sphi 0, %s54
      %s55 = sphi 0, %s52
      %s56 = sphi 0, %s55
      %s72 = sphi 0, %s56
      %s82 = sphi 0, %s84
      %s85 = sphi 0, %s82
      %s86 = sphi 0, %s85
      %s102 = sphi 0, %s86
      %s106 = sphi 0, %s106
      %s108 = sphi 0, %s106
      %s109 = sphi 0, %s108
      %s123 = sphi 0, %s109
      %s127 = sphi 0, %s127
      %s129 = sphi 0, %s127
      %s130 = sphi 0, %s129
      %s144 = sphi 0, %s130
      %s148 = sphi 0, %s148
      %s150 = sphi 0, %s148
      %s151 = sphi 0, %s150
      %s165 = sphi 0, %s151
      %s169 = sphi 0, %s169
      %s171 = sphi 0, %s169
      %s172 = sphi 0, %s171
      %s186 = sphi 0, %s172
      %s190 = sphi 0, %s190
      %s192 = sphi 0, %s190
      %s193 = sphi 0, %s192
      %s207 = sphi 0, %s193
      %s211 = sphi 0, %s211
      %s213 = sphi 0, %s211
      %s214 = sphi 0, %s213
      %s228 = sphi 0, %s214
      %s232 = sphi 0, %s232
      %s234 = sphi 0, %s232
      %s235 = sphi 0, %s234
      %s249 = sphi 0, %s235
      %s259 = sphi 0, %s261
      %s262 = sphi 0, %s259
      %s263 = sphi 0, %s262
      %s279 = sphi 0, %s263
    $region4: #{tpu_custom_call.1} parent=1 // loop_header_branch
      %29 = sbr.rel (%p27) target = $region8
    $region5: #{tpu_custom_call.1} parent=1 // loop_body
      %s31 = ssub.s32 %s26, 1
      %s32 = ssub.s32 %s26, 2
      %s39 = sadd.s32 1, %s34
      %p40 = scmp.ge.s32.totalorder %s39, 2
      %s41 = scalar_select %p40, 0, %s39
      %s42 = sadd.s32 1, %s33
      %s43 = scalar_select %p40, %s42, %s33
      %p44 = scmp.ge.s32.totalorder %s43, 1
      %s45 = scalar_select %p44, 0, %s43
      %s46 = ssub.s32 1, %s34
      %s47 = ssub.s32 1, %s41
      %s48 = ssub.s32 %s46, %s47
      %s49 = ssub.s32 %s33, %s45
      %s50 = sor.u32 %s48, %s49
      %p51 = scmp.eq.s32.totalorder %s50, 0
      %s53 = sadd.s32 %s52, 1
      %s54 = scalar_select %p51, %s52, %s53
      %p57 = pneg %p51
      %p58 = scmp.eq.s32.totalorder %s26, 1
      %p59 = por %p57, %p58
      %p60 = scmp.ne.s32.totalorder %s52, %s55
      %p61 = scmp.eq.s32.totalorder %s26, 0
      %p62 = por %p60, %p61
      %p63 = scmp.ne.s32.totalorder %s52, %s55
      %p64 = scmp.eq.s32.totalorder %s31, 1
      %p65 = por %p63, %p64
      %p66 = scmp.ne.s32.totalorder %s55, %s56
      %p67 = scmp.eq.s32.totalorder %s31, 0
      %p68 = por %p66, %p67
      %p69 = scmp.ne.s32.totalorder %s55, %s56
      %p70 = scmp.eq.s32.totalorder %s32, 1
      %p71 = por %p69, %p70
      %p73 = scmp.ne.s32.totalorder %s56, %s72
      %p74 = scmp.eq.s32.totalorder %s32, 0
      %p75 = por %p73, %p74
      %s76 = ssub.s32 1, %s34
      %s77 = ssub.s32 1, %s41
      %s78 = ssub.s32 %s76, %s77
      %s79 = ssub.s32 %s33, %s45
      %s80 = sor.u32 %s78, %s79
      %p81 = scmp.eq.s32.totalorder %s80, 0
      %s83 = sadd.s32 %s82, 1
      %s84 = scalar_select %p81, %s82, %s83
      %p87 = pneg %p81
      %p88 = scmp.eq.s32.totalorder %s26, 1
      %p89 = por %p87, %p88
      %p90 = scmp.ne.s32.totalorder %s82, %s85
      %p91 = scmp.eq.s32.totalorder %s26, 0
      %p92 = por %p90, %p91
      %p93 = scmp.ne.s32.totalorder %s82, %s85
      %p94 = scmp.eq.s32.totalorder %s31, 1
      %p95 = por %p93, %p94
      %p96 = scmp.ne.s32.totalorder %s85, %s86
      %p97 = scmp.eq.s32.totalorder %s31, 0
      %p98 = por %p96, %p97
      %p99 = scmp.ne.s32.totalorder %s85, %s86
      %p100 = scmp.eq.s32.totalorder %s32, 1
      %p101 = por %p99, %p100
      %p103 = scmp.ne.s32.totalorder %s86, %s102
      %p104 = scmp.eq.s32.totalorder %s32, 0
      %p105 = por %p103, %p104
      %s107 = sadd.s32 %s106, 1
      %p110 = scmp.eq.s32.totalorder %s26, 1
      %p111 = scmp.ne.s32.totalorder %s106, %s108
      %p112 = scmp.eq.s32.totalorder %s26, 0
      %p113 = por %p111, %p112
      %p114 = scmp.ne.s32.totalorder %s106, %s108
      %p115 = scmp.eq.s32.totalorder %s31, 1
      %p116 = por %p114, %p115
      %p117 = scmp.ne.s32.totalorder %s108, %s109
      %p118 = scmp.eq.s32.totalorder %s31, 0
      %p119 = por %p117, %p118
      %p120 = scmp.ne.s32.totalorder %s108, %s109
      %p121 = scmp.eq.s32.totalorder %s32, 1
      %p122 = por %p120, %p121
      %p124 = scmp.ne.s32.totalorder %s109, %s123
      %p125 = scmp.eq.s32.totalorder %s32, 0
      %p126 = por %p124, %p125
      %s128 = sadd.s32 %s127, 1
      %p131 = scmp.eq.s32.totalorder %s26, 1
      %p132 = scmp.ne.s32.totalorder %s127, %s129
      %p133 = scmp.eq.s32.totalorder %s26, 0
      %p134 = por %p132, %p133
      %p135 = scmp.ne.s32.totalorder %s127, %s129
      %p136 = scmp.eq.s32.totalorder %s31, 1
      %p137 = por %p135, %p136
      %p138 = scmp.ne.s32.totalorder %s129, %s130
      %p139 = scmp.eq.s32.totalorder %s31, 0
      %p140 = por %p138, %p139
      %p141 = scmp.ne.s32.totalorder %s129, %s130
      %p142 = scmp.eq.s32.totalorder %s32, 1
      %p143 = por %p141, %p142
      %p145 = scmp.ne.s32.totalorder %s130, %s144
      %p146 = scmp.eq.s32.totalorder %s32, 0
      %p147 = por %p145, %p146
      %s149 = sadd.s32 %s148, 1
      %p152 = scmp.eq.s32.totalorder %s26, 1
      %p153 = scmp.ne.s32.totalorder %s148, %s150
      %p154 = scmp.eq.s32.totalorder %s26, 0
      %p155 = por %p153, %p154
      %p156 = scmp.ne.s32.totalorder %s148, %s150
      %p157 = scmp.eq.s32.totalorder %s31, 1
      %p158 = por %p156, %p157
      %p159 = scmp.ne.s32.totalorder %s150, %s151
      %p160 = scmp.eq.s32.totalorder %s31, 0
      %p161 = por %p159, %p160
      %p162 = scmp.ne.s32.totalorder %s150, %s151
      %p163 = scmp.eq.s32.totalorder %s32, 1
      %p164 = por %p162, %p163
      %p166 = scmp.ne.s32.totalorder %s151, %s165
      %p167 = scmp.eq.s32.totalorder %s32, 0
      %p168 = por %p166, %p167
      %s170 = sadd.s32 %s169, 1
      %p173 = scmp.eq.s32.totalorder %s26, 1
      %p174 = scmp.ne.s32.totalorder %s169, %s171
      %p175 = scmp.eq.s32.totalorder %s26, 0
      %p176 = por %p174, %p175
      %p177 = scmp.ne.s32.totalorder %s169, %s171
      %p178 = scmp.eq.s32.totalorder %s31, 1
      %p179 = por %p177, %p178
      %p180 = scmp.ne.s32.totalorder %s171, %s172
      %p181 = scmp.eq.s32.totalorder %s31, 0
      %p182 = por %p180, %p181
      %p183 = scmp.ne.s32.totalorder %s171, %s172
      %p184 = scmp.eq.s32.totalorder %s32, 1
      %p185 = por %p183, %p184
      %p187 = scmp.ne.s32.totalorder %s172, %s186
      %p188 = scmp.eq.s32.totalorder %s32, 0
      %p189 = por %p187, %p188
      %s191 = sadd.s32 %s190, 1
      %p194 = scmp.eq.s32.totalorder %s26, 1
      %p195 = scmp.ne.s32.totalorder %s190, %s192
      %p196 = scmp.eq.s32.totalorder %s26, 0
      %p197 = por %p195, %p196
      %p198 = scmp.ne.s32.totalorder %s190, %s192
      %p199 = scmp.eq.s32.totalorder %s31, 1
      %p200 = por %p198, %p199
      %p201 = scmp.ne.s32.totalorder %s192, %s193
      %p202 = scmp.eq.s32.totalorder %s31, 0
      %p203 = por %p201, %p202
      %p204 = scmp.ne.s32.totalorder %s192, %s193
      %p205 = scmp.eq.s32.totalorder %s32, 1
      %p206 = por %p204, %p205
      %p208 = scmp.ne.s32.totalorder %s193, %s207
      %p209 = scmp.eq.s32.totalorder %s32, 0
      %p210 = por %p208, %p209
      %s212 = sadd.s32 %s211, 1
      %p215 = scmp.eq.s32.totalorder %s26, 1
      %p216 = scmp.ne.s32.totalorder %s211, %s213
      %p217 = scmp.eq.s32.totalorder %s26, 0
      %p218 = por %p216, %p217
      %p219 = scmp.ne.s32.totalorder %s211, %s213
      %p220 = scmp.eq.s32.totalorder %s31, 1
      %p221 = por %p219, %p220
      %p222 = scmp.ne.s32.totalorder %s213, %s214
      %p223 = scmp.eq.s32.totalorder %s31, 0
      %p224 = por %p222, %p223
      %p225 = scmp.ne.s32.totalorder %s213, %s214
      %p226 = scmp.eq.s32.totalorder %s32, 1
      %p227 = por %p225, %p226
      %p229 = scmp.ne.s32.totalorder %s214, %s228
      %p230 = scmp.eq.s32.totalorder %s32, 0
      %p231 = por %p229, %p230
      %s233 = sadd.s32 %s232, 1
      %p236 = scmp.eq.s32.totalorder %s26, 1
      %p237 = scmp.ne.s32.totalorder %s232, %s234
      %p238 = scmp.eq.s32.totalorder %s26, 0
      %p239 = por %p237, %p238
      %p240 = scmp.ne.s32.totalorder %s232, %s234
      %p241 = scmp.eq.s32.totalorder %s31, 1
      %p242 = por %p240, %p241
      %p243 = scmp.ne.s32.totalorder %s234, %s235
      %p244 = scmp.eq.s32.totalorder %s31, 0
      %p245 = por %p243, %p244
      %p246 = scmp.ne.s32.totalorder %s234, %s235
      %p247 = scmp.eq.s32.totalorder %s32, 1
      %p248 = por %p246, %p247
      %p250 = scmp.ne.s32.totalorder %s235, %s249
      %p251 = scmp.eq.s32.totalorder %s32, 0
      %p252 = por %p250, %p251
      %s253 = ssub.s32 1, %s34
      %s254 = ssub.s32 1, %s41
      %s255 = ssub.s32 %s253, %s254
      %s256 = ssub.s32 %s33, %s45
      %s257 = sor.u32 %s255, %s256
      %p258 = scmp.eq.s32.totalorder %s257, 0
      %s260 = sadd.s32 %s259, 1
      %s261 = scalar_select %p258, %s259, %s260
      %p264 = pneg %p258
      %p265 = scmp.eq.s32.totalorder %s26, 1
      %p266 = por %p264, %p265
      %p267 = scmp.ne.s32.totalorder %s259, %s262
      %p268 = scmp.eq.s32.totalorder %s26, 0
      %p269 = por %p267, %p268
      %p270 = scmp.ne.s32.totalorder %s259, %s262
      %p271 = scmp.eq.s32.totalorder %s31, 1
      %p272 = por %p270, %p271
      %p273 = scmp.ne.s32.totalorder %s262, %s263
      %p274 = scmp.eq.s32.totalorder %s31, 0
      %p275 = por %p273, %p274
      %p276 = scmp.ne.s32.totalorder %s262, %s263
      %p277 = scmp.eq.s32.totalorder %s32, 1
      %p278 = por %p276, %p277
      %p280 = scmp.ne.s32.totalorder %s263, %s279
      %p281 = scmp.eq.s32.totalorder %s32, 0
      %p282 = por %p280, %p281
      %p283 = scmp.le.s32.totalorder 1, %s26
      %p284 = scmp.lt.s32.totalorder %s26, 3
      %p285 = pnand %p283, %p284
      %p286 = pneg %p285
      // Predicated region
      $region9: #{tpu_custom_call.1} parent=5 // pred_check
        _
      $region10: #{tpu_custom_call.1} parent=5 // pred_check_branch
        %288 = sbr.rel (%p285) target = $region12
      $region11: #{tpu_custom_call.1} parent=5 // pred_region
        %s289 = ssub.s32 %s26, 1
        // Predicated region
        $region13: #{tpu_custom_call.1} parent=11 // pred_check
          %p290 = pneg %p119
        $region14: #{tpu_custom_call.1} parent=11 // pred_check_branch
          %292 = sbr.rel (%p290) target = $region16
        $region15: #{tpu_custom_call.1} parent=11 // pred_region
          %s294 = ssub.s32 2048, 2048
          %295 = vsyncadd [#allocation7], %s294
          %s296 = sshll.u32 [#allocation8], 4
          %s297 = int_to_ptr.vmem [resolvable:$true] %s296
          %302 = dma.hbm_to_vmem [thread:$0]  %s2, 2048, %s297, [#allocation7], 64, 64, 4
        $region16: #{tpu_custom_call.1} parent=11 // pred_fallthru
          _
        // Predicated region
        $region17: #{tpu_custom_call.1} parent=11 // pred_check
          %p303 = pneg %p140
        $region18: #{tpu_custom_call.1} parent=11 // pred_check_branch
          %305 = sbr.rel (%p303) target = $region20
        $region19: #{tpu_custom_call.1} parent=11 // pred_region
          %s307 = ssub.s32 2048, 2048
          %308 = vsyncadd [#allocation10], %s307
          %s309 = sshll.u32 [#allocation9], 4
          %s310 = int_to_ptr.vmem [resolvable:$true] %s309
          %315 = dma.hbm_to_vmem [thread:$0]  %s3, 2048, %s310, [#allocation10], 64, 64, 4
        $region20: #{tpu_custom_call.1} parent=11 // pred_fallthru
          _
        // Predicated region
        $region21: #{tpu_custom_call.1} parent=11 // pred_check
          %p316 = pneg %p161
        $region22: #{tpu_custom_call.1} parent=11 // pred_check_branch
          %318 = sbr.rel (%p316) target = $region24
        $region23: #{tpu_custom_call.1} parent=11 // pred_region
          _
        $region24: #{tpu_custom_call.1} parent=11 // pred_fallthru
          _
        // Predicated region
        $region25: #{tpu_custom_call.1} parent=11 // pred_check
          %p319 = pneg %p182
        $region26: #{tpu_custom_call.1} parent=11 // pred_check_branch
          %321 = sbr.rel (%p319) target = $region28
        $region27: #{tpu_custom_call.1} parent=11 // pred_region
          %s323 = ssub.s32 4096, 4096
          %324 = vsyncadd [#allocation10], %s323
          %s325 = sshll.u32 [#allocation11], 4
          %s326 = int_to_ptr.vmem [resolvable:$true] %s325
          %331 = dma.hbm_to_vmem [thread:$0]  %s5, 4096, %s326, [#allocation10], 64, 64, 4
        $region28: #{tpu_custom_call.1} parent=11 // pred_fallthru
          _
        // Predicated region
        $region29: #{tpu_custom_call.1} parent=11 // pred_check
          %p332 = pneg %p203
        $region30: #{tpu_custom_call.1} parent=11 // pred_check_branch
          %334 = sbr.rel (%p332) target = $region32
        $region31: #{tpu_custom_call.1} parent=11 // pred_region
          _
        $region32: #{tpu_custom_call.1} parent=11 // pred_fallthru
          _
        // Predicated region
        $region33: #{tpu_custom_call.1} parent=11 // pred_check
          %p335 = pneg %p224
        $region34: #{tpu_custom_call.1} parent=11 // pred_check_branch
          %337 = sbr.rel (%p335) target = $region36
        $region35: #{tpu_custom_call.1} parent=11 // pred_region
          %s339 = ssub.s32 4096, 4096
          %340 = vsyncadd [#allocation13], %s339
          %s341 = sshll.u32 [#allocation12], 4
          %s342 = int_to_ptr.vmem [resolvable:$true] %s341
          %347 = dma.hbm_to_vmem [thread:$0]  %s7, 4096, %s342, [#allocation13], 128, 128, 8
        $region36: #{tpu_custom_call.1} parent=11 // pred_fallthru
          _
        // Predicated region
        $region37: #{tpu_custom_call.1} parent=11 // pred_check
          %p348 = pneg %p245
        $region38: #{tpu_custom_call.1} parent=11 // pred_check_branch
          %350 = sbr.rel (%p348) target = $region40
        $region39: #{tpu_custom_call.1} parent=11 // pred_region
          _
        $region40: #{tpu_custom_call.1} parent=11 // pred_fallthru
          _
      $region12: #{tpu_custom_call.1} parent=5 // pred_fallthru
        _
      %p351 = scmp.lt.s32.totalorder %s26, 2
      // Predicated region
      $region41: #{tpu_custom_call.1} parent=5 // pred_check
        %p352 = pneg %p351
      $region42: #{tpu_custom_call.1} parent=5 // pred_check_branch
        %354 = sbr.rel (%p352) target = $region44
      $region43: #{tpu_custom_call.1} parent=5 // pred_region
        // Predicated region
        $region45: #{tpu_custom_call.1} parent=43 // pred_check
          %p355 = pneg %p62
        $region46: #{tpu_custom_call.1} parent=43 // pred_check_branch
          %357 = sbr.rel (%p355) target = $region48
        $region47: #{tpu_custom_call.1} parent=43 // pred_region
          %s358 = sand.u32 %s52, 1
          %s359 = scalar_lea.sflag [#allocation4], %s358
          %s360 = sand.u32 %s52, 1
          %s361 = smul.addr %s360, 16
          %s362 = scalar_lea.vmem [#allocation3], %s361
          %s363 = ssub.s32 1, %s34
          %s364 = smul.u32 4, %s33
          %s366 = ssub.s32 256, 256
          %367 = vsyncadd %s359, %s366
          %s368 = smul.addr %s363, 4
          %s369 = sadd.s32 %s364, %s368
          %s370 = smul.addr %s369, 64
          %s371 = scalar_lea.hbm %s0, %s370
          %s372 = sshll.u32 %s362, 4
          %s373 = int_to_ptr.vmem [resolvable:$true] %s372
          %378 = dma.hbm_to_vmem [thread:$0]  %s371, 256, %s373, %s359, 64, 64, 4
        $region48: #{tpu_custom_call.1} parent=43 // pred_fallthru
          _
        // Predicated region
        $region49: #{tpu_custom_call.1} parent=43 // pred_check
          %p379 = pneg %p92
        $region50: #{tpu_custom_call.1} parent=43 // pred_check_branch
          %381 = sbr.rel (%p379) target = $region52
        $region51: #{tpu_custom_call.1} parent=43 // pred_region
          %s382 = sand.u32 %s26, 1
          %s383 = scalar_lea.sflag [#allocation7], %s382
          %s384 = sand.u32 %s82, 1
          %s385 = smul.addr %s384, 32
          %s386 = scalar_lea.vmem [#allocation6], %s385
          %s387 = ssub.s32 1, %s34
          %s388 = smul.u32 4, %s33
          %s390 = ssub.s32 512, 512
          %391 = vsyncadd %s383, %s390
          %s392 = smul.addr %s387, 4
          %s393 = sadd.s32 %s388, %s392
          %s394 = smul.addr %s393, 128
          %s395 = scalar_lea.hbm %s1, %s394
          %s396 = sshll.u32 %s386, 4
          %s397 = int_to_ptr.vmem [resolvable:$true] %s396
          %402 = dma.hbm_to_vmem [thread:$0]  %s395, 512, %s397, %s383, 128, 128, 8
        $region52: #{tpu_custom_call.1} parent=43 // pred_fallthru
          _
      $region44: #{tpu_custom_call.1} parent=5 // pred_fallthru
        _
      %p403 = scmp.le.s32.totalorder 1, %s26
      %p404 = scmp.lt.s32.totalorder %s26, 3
      %p405 = pnand %p403, %p404
      %p406 = pneg %p405
      // Predicated region
      $region53: #{tpu_custom_call.1} parent=5 // pred_check
        _
      $region54: #{tpu_custom_call.1} parent=5 // pred_check_branch
        %408 = sbr.rel (%p405) target = $region56
      $region55: #{tpu_custom_call.1} parent=5 // pred_region
        %s409 = ssub.s32 %s26, 1
        %s410 = sand.u32 %s55, 1
        %s411 = scalar_lea.sflag [#allocation4], %s410
        %s412 = sand.u32 %s55, 1
        %s413 = smul.addr %s412, 16
        %s414 = scalar_lea.vmem [#allocation3], %s413
        // Predicated region
        $region57: #{tpu_custom_call.1} parent=55 // pred_check
          %p415 = pneg %p68
        $region58: #{tpu_custom_call.1} parent=55 // pred_check_branch
          %417 = sbr.rel (%p415) target = $region60
        $region59: #{tpu_custom_call.1} parent=55 // pred_region
          %418 = dma.done %s411, 256
        $region60: #{tpu_custom_call.1} parent=55 // pred_fallthru
          _
        %s419 = sand.u32 %s31, 1
        %s420 = scalar_lea.sflag [#allocation7], %s419
        %s421 = sand.u32 %s85, 1
        %s422 = smul.addr %s421, 32
        %s423 = scalar_lea.vmem [#allocation6], %s422
        // Predicated region
        $region61: #{tpu_custom_call.1} parent=55 // pred_check
          %p424 = pneg %p98
        $region62: #{tpu_custom_call.1} parent=55 // pred_check_branch
          %426 = sbr.rel (%p424) target = $region64
        $region63: #{tpu_custom_call.1} parent=55 // pred_region
          %427 = dma.done %s420, 512
        $region64: #{tpu_custom_call.1} parent=55 // pred_fallthru
          _
        // Predicated region
        $region65: #{tpu_custom_call.1} parent=55 // pred_check
          %p428 = pneg %p119
        $region66: #{tpu_custom_call.1} parent=55 // pred_check_branch
          %430 = sbr.rel (%p428) target = $region68
        $region67: #{tpu_custom_call.1} parent=55 // pred_region
          %431 = dma.done [#allocation7], 2048
        $region68: #{tpu_custom_call.1} parent=55 // pred_fallthru
          _
        // Predicated region
        $region69: #{tpu_custom_call.1} parent=55 // pred_check
          %p432 = pneg %p140
        $region70: #{tpu_custom_call.1} parent=55 // pred_check_branch
          %434 = sbr.rel (%p432) target = $region72
        $region71: #{tpu_custom_call.1} parent=55 // pred_region
          %435 = dma.done [#allocation10], 2048
        $region72: #{tpu_custom_call.1} parent=55 // pred_fallthru
          _
        // Predicated region
        $region73: #{tpu_custom_call.1} parent=55 // pred_check
          %p436 = pneg %p182
        $region74: #{tpu_custom_call.1} parent=55 // pred_check_branch
          %438 = sbr.rel (%p436) target = $region76
        $region75: #{tpu_custom_call.1} parent=55 // pred_region
          %439 = dma.done [#allocation10], 4096
        $region76: #{tpu_custom_call.1} parent=55 // pred_fallthru
          _
        // Predicated region
        $region77: #{tpu_custom_call.1} parent=55 // pred_check
          %p440 = pneg %p224
        $region78: #{tpu_custom_call.1} parent=55 // pred_check_branch
          %442 = sbr.rel (%p440) target = $region80
        $region79: #{tpu_custom_call.1} parent=55 // pred_region
          %443 = dma.done [#allocation13], 4096
        $region80: #{tpu_custom_call.1} parent=55 // pred_fallthru
          _
        %s444 = sand.u32 %s55, 1
        %s445 = scalar_lea.sflag [#allocation4], %s444
        %s446 = sand.u32 %s55, 1
        %s447 = smul.addr %s446, 16
        %s448 = scalar_lea.vmem [#allocation3], %s447
        %p449 = pneg %p68
        %p450 = pneg %p65
        %s451 = sand.u32 %s31, 1
        %s452 = scalar_lea.sflag [#allocation7], %s451
        %s453 = sand.u32 %s85, 1
        %s454 = smul.addr %s453, 32
        %s455 = scalar_lea.vmem [#allocation6], %s454
        %p456 = pneg %p98
        %p457 = pneg %p95
        %p458 = pneg %p119
        %p459 = pneg %p116
        %p460 = pneg %p140
        %p461 = pneg %p137
        %p462 = pneg %p161
        %p463 = pneg %p158
        %p464 = pneg %p182
        %p465 = pneg %p179
        %p466 = pneg %p203
        %p467 = pneg %p200
        %p468 = pneg %p224
        %p469 = pneg %p221
        %p470 = pneg %p245
        %p471 = pneg %p242
        %p472 = pneg %p275
        %p473 = pneg %p272
        %s474 = sand.u32 %s262, 1
        %s475 = scalar_lea.sflag [#allocation5], %s474
        %s476 = sand.u32 %s262, 1
        %s477 = smul.addr %s476, 96
        %s478 = scalar_lea.vmem [#allocation14], %s477
        %s479 = ssub.s32 1, %s36
        %s480 = smul.u32 4, %s35
        %s481 = ssub.s32 1, %s36
        %s482 = smul.u32 4, %s35
        %s483 = ssub.s32 1, %s36
        %s484 = smul.u32 4, %s35
        %s486 = ssub.s32 1, %s36
        %p487 = scmp.eq.s32.totalorder %s36, 0
        // Predicated region
        $region81: #{tpu_custom_call.1} parent=55 // pred_check
          %p488 = pneg %p487
        $region82: #{tpu_custom_call.1} parent=55 // pred_check_branch
          %490 = sbr.rel (%p488) target = $region84
        $region83: #{tpu_custom_call.1} parent=55 // pred_region
          %491 = vst [vmem:[#allocation2] sm:$0xff] 0.0
          %492 = vst [vmem:[#allocation2 + $0x8] sm:$0xff] 0.0
          %493 = vst [vmem:[#allocation2 + $0x10] sm:$0xff] 0.0
          %494 = vst [vmem:[#allocation2 + $0x18] sm:$0xff] 0.0
        $region84: #{tpu_custom_call.1} parent=55 // pred_fallthru
          _
        %v495 = vld [vmem:[%s414] sm:$0xf]
        %v496 = vld [vmem:[%s414 + $0x4] sm:$0xf]
        %v497 = vld [vmem:[%s414 + $0x8] sm:$0xf]
        %v498 = vld [vmem:[%s414 + $0xc] sm:$0xf]
        %s499 = smul.u32 %s486, 16
        %s500 = smul.addr %s499, 4
        %s501 = scalar_lea.vmem [#allocation8], %s500
        %v502 = vld [vmem:[%s501] sm:$0xf]
        %v503 = vld [vmem:[%s501 + $0x4] sm:$0xf]
        %v504 = vld [vmem:[%s501 + $0x8] sm:$0xf]
        %v505 = vld [vmem:[%s501 + $0xc] sm:$0xf]
        %v506 = vld [vmem:[%s501 + $0x10] sm:$0xf]
        %v507 = vld [vmem:[%s501 + $0x14] sm:$0xf]
        %v508 = vld [vmem:[%s501 + $0x18] sm:$0xf]
        %v509 = vld [vmem:[%s501 + $0x1c] sm:$0xf]
        %v510 = vld [vmem:[%s501 + $0x20] sm:$0xf]
        %v511 = vld [vmem:[%s501 + $0x24] sm:$0xf]
        %v512 = vld [vmem:[%s501 + $0x28] sm:$0xf]
        %v513 = vld [vmem:[%s501 + $0x2c] sm:$0xf]
        %v514 = vld [vmem:[%s501 + $0x30] sm:$0xf]
        %v515 = vld [vmem:[%s501 + $0x34] sm:$0xf]
        %v516 = vld [vmem:[%s501 + $0x38] sm:$0xf]
        %v517 = vld [vmem:[%s501 + $0x3c] sm:$0xf]
        %v518 = vld [vmem:[#allocation2] sm:$0xff]
        %v519 = vld [vmem:[#allocation2 + $0x8] sm:$0xff]
        %v520 = vld [vmem:[#allocation2 + $0x10] sm:$0xff]
        %v521 = vld [vmem:[#allocation2 + $0x18] sm:$0xff]
        %v522 = vpack.c.bf16 %v519, %v518
        %v523 = vpack.c.bf16 %v521, %v520
        %s524 = smul.addr %s499, 4
        %s525 = scalar_lea.vmem [#allocation9], %s524
        %v526 = vld [vmem:[%s525] sm:$0xf]
        %v527 = vld [vmem:[%s525 + $0x4] sm:$0xf]
        %v528 = vld [vmem:[%s525 + $0x8] sm:$0xf]
        %v529 = vld [vmem:[%s525 + $0xc] sm:$0xf]
        %v530 = vld [vmem:[%s525 + $0x10] sm:$0xf]
        %v531 = vld [vmem:[%s525 + $0x14] sm:$0xf]
        %v532 = vld [vmem:[%s525 + $0x18] sm:$0xf]
        %v533 = vld [vmem:[%s525 + $0x1c] sm:$0xf]
        %v534 = vld [vmem:[%s525 + $0x20] sm:$0xf]
        %v535 = vld [vmem:[%s525 + $0x24] sm:$0xf]
        %v536 = vld [vmem:[%s525 + $0x28] sm:$0xf]
        %v537 = vld [vmem:[%s525 + $0x2c] sm:$0xf]
        %v538 = vld [vmem:[%s525 + $0x30] sm:$0xf]
        %v539 = vld [vmem:[%s525 + $0x34] sm:$0xf]
        %v540 = vld [vmem:[%s525 + $0x38] sm:$0xf]
        %v541 = vld [vmem:[%s525 + $0x3c] sm:$0xf]
        %v558 = vunpack.c.l.b16 %v526
        %v559 = vunpack.c.l.b16 %v527
        %v560 = vunpack.c.l.b16 %v528
        %v561 = vunpack.c.l.b16 %v529
        %v562 = vunpack.c.l.b16 %v530
        %v563 = vunpack.c.l.b16 %v531
        %v564 = vunpack.c.l.b16 %v532
        %v565 = vunpack.c.l.b16 %v533
        %v566 = vunpack.c.l.b16 %v534
        %v567 = vunpack.c.l.b16 %v535
        %v568 = vunpack.c.l.b16 %v536
        %v569 = vunpack.c.l.b16 %v537
        %v570 = vunpack.c.l.b16 %v538
        %v571 = vunpack.c.l.b16 %v539
        %v572 = vunpack.c.l.b16 %v540
        %v573 = vunpack.c.l.b16 %v541
        %v574 = vpack.c.b16 %v559, %v558
        %v575 = vpack.c.b16 %v561, %v560
        %v576 = vpack.c.b16 %v563, %v562
        %v577 = vpack.c.b16 %v565, %v564
        %v578 = vpack.c.b16 %v567, %v566
        %v579 = vpack.c.b16 %v569, %v568
        %v580 = vpack.c.b16 %v571, %v570
        %v581 = vpack.c.b16 %v573, %v572
        %590 = vmatprep.subr.bf16.mxu0 0
        %591 = vmatpush1.bf16.msra.mxu0 %v574
        %592 = vmatprep.subr.bf16.mxu0 0
        %593 = vmatpush1.bf16.msra.mxu0 %v575
        %594 = vmatprep.subr.bf16.mxu0 0
        %595 = vmatpush1.bf16.msra.mxu0 %v576
        %596 = vmatprep.subr.bf16.mxu0 0
        %597 = vmatpush1.bf16.msra.mxu0 %v577
        %598 = vmatprep.subr.bf16.mxu0 0
        %599 = vmatpush1.bf16.msra.mxu0 %v578
        %600 = vmatprep.subr.bf16.mxu0 0
        %601 = vmatpush1.bf16.msra.mxu0 %v579
        %602 = vmatprep.subr.bf16.mxu0 0
        %603 = vmatpush1.bf16.msra.mxu0 %v580
        %604 = vmatprep.subr.bf16.mxu0 0
        %605 = vmatpush1.bf16.msra.mxu0 %v581
        %606 = vmatprep.subr.bf16.mxu0 0
        %607 = vmatpush1.bf16.msra.mxu0 0
        %608 = vmatprep.subr.bf16.mxu0 0
        %609 = vmatpush1.bf16.msra.mxu0 0
        %610 = vmatprep.subr.bf16.mxu0 0
        %611 = vmatpush1.bf16.msra.mxu0 0
        %612 = vmatprep.subr.bf16.mxu0 0
        %613 = vmatpush1.bf16.msra.mxu0 0
        %614 = vmatprep.subr.bf16.mxu0 0
        %615 = vmatpush1.bf16.msra.mxu0 0
        %616 = vmatprep.subr.bf16.mxu0 0
        %617 = vmatpush1.bf16.msra.mxu0 0
        %618 = vmatprep.subr.bf16.mxu0 0
        %619 = vmatpush1.bf16.msra.mxu0 0
        %620 = vmatprep.subr.bf16.mxu0 0
        %621 = vmatpush1.bf16.msra.mxu0 0
        %622 = vmatprep.mubr.bf16.mxu0 0
        %623 = vmatmul.mubr.bf16.gmra.mrb[0].mxu0 %v522
        %v624 = vpop.f32.mrb[0].mxu0
        %v625 = vadd.f32 0.0, %v624
        %v626 = vpop.f32.mrb[0].mxu0
        %v627 = vpop.f32.mrb[0].mxu0
        %v628 = vadd.f32 0.0, %v627
        %v629 = vpop.f32.mrb[0].mxu0
        %630 = vmatprep.mubr.bf16.mxu0 0
        %631 = vmatmul.mubr.bf16.gmra.mrb[0].mxu0 %v523
        %v632 = vpop.f32.mrb[0].mxu0
        %v633 = vadd.f32 0.0, %v632
        %v634 = vpop.f32.mrb[0].mxu0
        %v635 = vpop.f32.mrb[0].mxu0
        %v636 = vadd.f32 0.0, %v635
        %v637 = vpop.f32.mrb[0].mxu0
        %638 = vdwg.mxu0
        %v643 = vunpack.c.l.b16 %v495
        %v644 = vunpack.c.l.b16 %v496
        %v645 = vunpack.c.l.b16 %v497
        %v646 = vunpack.c.l.b16 %v498
        %v647 = vpack.c.b16 %v644, %v643
        %v648 = vpack.c.b16 %v646, %v645
        %v667 = vunpack.c.l.b16 %v502
        %v668 = vunpack.c.l.b16 %v503
        %v669 = vunpack.c.l.b16 %v504
        %v670 = vunpack.c.l.b16 %v505
        %v671 = vunpack.c.l.b16 %v506
        %v672 = vunpack.c.l.b16 %v507
        %v673 = vunpack.c.l.b16 %v508
        %v674 = vunpack.c.l.b16 %v509
        %v675 = vunpack.c.l.b16 %v510
        %v676 = vunpack.c.l.b16 %v511
        %v677 = vunpack.c.l.b16 %v512
        %v678 = vunpack.c.l.b16 %v513
        %v679 = vunpack.c.l.b16 %v514
        %v680 = vunpack.c.l.b16 %v515
        %v681 = vunpack.c.l.b16 %v516
        %v682 = vunpack.c.l.b16 %v517
        %v683 = vpack.c.b16 %v668, %v667
        %v684 = vpack.c.b16 %v670, %v669
        %v685 = vpack.c.b16 %v672, %v671
        %v686 = vpack.c.b16 %v674, %v673
        %v687 = vpack.c.b16 %v676, %v675
        %v688 = vpack.c.b16 %v678, %v677
        %v689 = vpack.c.b16 %v680, %v679
        %v690 = vpack.c.b16 %v682, %v681
        %699 = vmatprep.subr.bf16.mxu0 0
        %700 = vmatpush1.bf16.msra.mxu0 %v683
        %701 = vmatprep.subr.bf16.mxu0 0
        %702 = vmatpush1.bf16.msra.mxu0 %v684
        %703 = vmatprep.subr.bf16.mxu0 0
        %704 = vmatpush1.bf16.msra.mxu0 %v685
        %705 = vmatprep.subr.bf16.mxu0 0
        %706 = vmatpush1.bf16.msra.mxu0 %v686
        %707 = vmatprep.subr.bf16.mxu0 0
        %708 = vmatpush1.bf16.msra.mxu0 %v687
        %709 = vmatprep.subr.bf16.mxu0 0
        %710 = vmatpush1.bf16.msra.mxu0 %v688
        %711 = vmatprep.subr.bf16.mxu0 0
        %712 = vmatpush1.bf16.msra.mxu0 %v689
        %713 = vmatprep.subr.bf16.mxu0 0
        %714 = vmatpush1.bf16.msra.mxu0 %v690
        %715 = vmatprep.subr.bf16.mxu0 0
        %716 = vmatpush1.bf16.msra.mxu0 0
        %717 = vmatprep.subr.bf16.mxu0 0
        %718 = vmatpush1.bf16.msra.mxu0 0
        %719 = vmatprep.subr.bf16.mxu0 0
        %720 = vmatpush1.bf16.msra.mxu0 0
        %721 = vmatprep.subr.bf16.mxu0 0
        %722 = vmatpush1.bf16.msra.mxu0 0
        %723 = vmatprep.subr.bf16.mxu0 0
        %724 = vmatpush1.bf16.msra.mxu0 0
        %725 = vmatprep.subr.bf16.mxu0 0
        %726 = vmatpush1.bf16.msra.mxu0 0
        %727 = vmatprep.subr.bf16.mxu0 0
        %728 = vmatpush1.bf16.msra.mxu0 0
        %729 = vmatprep.subr.bf16.mxu0 0
        %730 = vmatpush1.bf16.msra.mxu0 0
        %731 = vmatprep.mubr.bf16.mxu0 0
        %732 = vmatmul.mubr.bf16.gmra.mrb[0].mxu0 %v647
        %v733 = vpop.f32.mrb[0].mxu0
        %v734 = vadd.f32 %v625, %v733
        %v735 = vpop.f32.mrb[0].mxu0
        %v736 = vpop.f32.mrb[0].mxu0
        %v737 = vadd.f32 %v628, %v736
        %v738 = vpop.f32.mrb[0].mxu0
        %739 = vmatprep.mubr.bf16.mxu0 0
        %740 = vmatmul.mubr.bf16.gmra.mrb[0].mxu0 %v648
        %v741 = vpop.f32.mrb[0].mxu0
        %v742 = vadd.f32 %v633, %v741
        %v743 = vpop.f32.mrb[0].mxu0
        %v744 = vpop.f32.mrb[0].mxu0
        %v745 = vadd.f32 %v636, %v744
        %v746 = vpop.f32.mrb[0].mxu0
        %747 = vdwg.mxu0
        %s748 = scalar_lea.vmem %s4, %s486
        %v749 = vld [vmem:[%s748] sm:$0x1]
        %v751 = vlaneseq
        %v752 = vshrl.u32 %v751, 7
        %v753 = vsub.s32 0, %v752
        %v754 = vrot.slane %v749, %v753
        %v756 = vadd.f32 %v734, %v754
        %v757 = vadd.f32 %v737, %v754
        %v758 = vadd.f32 %v742, %v754
        %v759 = vadd.f32 %v745, %v754
        %v760 = vtanh.pop %v756
        %v761 = vtanh.pop %v757
        %v762 = vtanh.pop %v758
        %v763 = vtanh.pop %v759
        %v764 = vpack.c.bf16 %v761, %v760
        %v765 = vpack.c.bf16 %v763, %v762
        %s766 = smul.u32 %s486, 2
        %s767 = smul.u32 %s766, 16
        %s768 = smul.addr %s767, 4
        %s769 = scalar_lea.vmem [#allocation11], %s768
        %v770 = vld [vmem:[%s769] sm:$0xf]
        %v771 = vld [vmem:[%s769 + $0x4] sm:$0xf]
        %v772 = vld [vmem:[%s769 + $0x8] sm:$0xf]
        %v773 = vld [vmem:[%s769 + $0xc] sm:$0xf]
        %v774 = vld [vmem:[%s769 + $0x10] sm:$0xf]
        %v775 = vld [vmem:[%s769 + $0x14] sm:$0xf]
        %v776 = vld [vmem:[%s769 + $0x18] sm:$0xf]
        %v777 = vld [vmem:[%s769 + $0x1c] sm:$0xf]
        %v778 = vld [vmem:[%s769 + $0x20] sm:$0xf]
        %v779 = vld [vmem:[%s769 + $0x24] sm:$0xf]
        %v780 = vld [vmem:[%s769 + $0x28] sm:$0xf]
        %v781 = vld [vmem:[%s769 + $0x2c] sm:$0xf]
        %v782 = vld [vmem:[%s769 + $0x30] sm:$0xf]
        %v783 = vld [vmem:[%s769 + $0x34] sm:$0xf]
        %v784 = vld [vmem:[%s769 + $0x38] sm:$0xf]
        %v785 = vld [vmem:[%s769 + $0x3c] sm:$0xf]
        %s786 = scalar_lea.vmem %s6, %s766
        %v787 = vld [vmem:[%s786] sm:$0x1]
        %v789 = vlaneseq
        %v790 = vshrl.u32 %v789, 7
        %v791 = vsub.s32 0, %v790
        %v792 = vrot.slane %v787, %v791
        %v810 = vunpack.c.l.b16 %v770
        %v811 = vunpack.c.l.b16 %v771
        %v812 = vunpack.c.l.b16 %v772
        %v813 = vunpack.c.l.b16 %v773
        %v814 = vunpack.c.l.b16 %v774
        %v815 = vunpack.c.l.b16 %v775
        %v816 = vunpack.c.l.b16 %v776
        %v817 = vunpack.c.l.b16 %v777
        %v818 = vunpack.c.l.b16 %v778
        %v819 = vunpack.c.l.b16 %v779
        %v820 = vunpack.c.l.b16 %v780
        %v821 = vunpack.c.l.b16 %v781
        %v822 = vunpack.c.l.b16 %v782
        %v823 = vunpack.c.l.b16 %v783
        %v824 = vunpack.c.l.b16 %v784
        %v825 = vunpack.c.l.b16 %v785
        %v826 = vpack.c.b16 %v811, %v810
        %v827 = vpack.c.b16 %v813, %v812
        %v828 = vpack.c.b16 %v815, %v814
        %v829 = vpack.c.b16 %v817, %v816
        %v830 = vpack.c.b16 %v819, %v818
        %v831 = vpack.c.b16 %v821, %v820
        %v832 = vpack.c.b16 %v823, %v822
        %v833 = vpack.c.b16 %v825, %v824
        %842 = vmatprep.subr.bf16.mxu0 0
        %843 = vmatpush1.bf16.msra.mxu0 %v826
        %844 = vmatprep.subr.bf16.mxu0 0
        %845 = vmatpush1.bf16.msra.mxu0 %v827
        %846 = vmatprep.subr.bf16.mxu0 0
        %847 = vmatpush1.bf16.msra.mxu0 %v828
        %848 = vmatprep.subr.bf16.mxu0 0
        %849 = vmatpush1.bf16.msra.mxu0 %v829
        %850 = vmatprep.subr.bf16.mxu0 0
        %851 = vmatpush1.bf16.msra.mxu0 %v830
        %852 = vmatprep.subr.bf16.mxu0 0
        %853 = vmatpush1.bf16.msra.mxu0 %v831
        %854 = vmatprep.subr.bf16.mxu0 0
        %855 = vmatpush1.bf16.msra.mxu0 %v832
        %856 = vmatprep.subr.bf16.mxu0 0
        %857 = vmatpush1.bf16.msra.mxu0 %v833
        %858 = vmatprep.subr.bf16.mxu0 0
        %859 = vmatpush1.bf16.msra.mxu0 0
        %860 = vmatprep.subr.bf16.mxu0 0
        %861 = vmatpush1.bf16.msra.mxu0 0
        %862 = vmatprep.subr.bf16.mxu0 0
        %863 = vmatpush1.bf16.msra.mxu0 0
        %864 = vmatprep.subr.bf16.mxu0 0
        %865 = vmatpush1.bf16.msra.mxu0 0
        %866 = vmatprep.subr.bf16.mxu0 0
        %867 = vmatpush1.bf16.msra.mxu0 0
        %868 = vmatprep.subr.bf16.mxu0 0
        %869 = vmatpush1.bf16.msra.mxu0 0
        %870 = vmatprep.subr.bf16.mxu0 0
        %871 = vmatpush1.bf16.msra.mxu0 0
        %872 = vmatprep.subr.bf16.mxu0 0
        %873 = vmatpush1.bf16.msra.mxu0 0
        %874 = vmatprep.mubr.bf16.mxu0 0
        %875 = vmatmul.mubr.bf16.gmra.mrb[0].mxu0 %v764
        %v876 = vpop.f32.mrb[0].mxu0
        %v877 = vadd.f32 %v792, %v876
        %v878 = vpop.f32.mrb[0].mxu0
        %v879 = vpop.f32.mrb[0].mxu0
        %v880 = vadd.f32 %v792, %v879
        %v881 = vpop.f32.mrb[0].mxu0
        %882 = vmatprep.mubr.bf16.mxu0 0
        %883 = vmatmul.mubr.bf16.gmra.mrb[0].mxu0 %v765
        %v884 = vpop.f32.mrb[0].mxu0
        %v885 = vadd.f32 %v792, %v884
        %v886 = vpop.f32.mrb[0].mxu0
        %v887 = vpop.f32.mrb[0].mxu0
        %v888 = vadd.f32 %v792, %v887
        %v889 = vpop.f32.mrb[0].mxu0
        %890 = vdwg.mxu0
        %v891 = vtanh.pop %v877
        %v892 = vtanh.pop %v880
        %v893 = vtanh.pop %v885
        %v894 = vtanh.pop %v888
        %v895 = vpack.c.bf16 %v892, %v891
        %v896 = vpack.c.bf16 %v894, %v893
        %s897 = sadd.s32 %s766, 1
        %s898 = smul.u32 %s897, 16
        %s899 = smul.addr %s898, 4
        %s900 = scalar_lea.vmem [#allocation11], %s899
        %v901 = vld [vmem:[%s900] sm:$0xf]
        %v902 = vld [vmem:[%s900 + $0x4] sm:$0xf]
        %v903 = vld [vmem:[%s900 + $0x8] sm:$0xf]
        %v904 = vld [vmem:[%s900 + $0xc] sm:$0xf]
        %v905 = vld [vmem:[%s900 + $0x10] sm:$0xf]
        %v906 = vld [vmem:[%s900 + $0x14] sm:$0xf]
        %v907 = vld [vmem:[%s900 + $0x18] sm:$0xf]
        %v908 = vld [vmem:[%s900 + $0x1c] sm:$0xf]
        %v909 = vld [vmem:[%s900 + $0x20] sm:$0xf]
        %v910 = vld [vmem:[%s900 + $0x24] sm:$0xf]
        %v911 = vld [vmem:[%s900 + $0x28] sm:$0xf]
        %v912 = vld [vmem:[%s900 + $0x2c] sm:$0xf]
        %v913 = vld [vmem:[%s900 + $0x30] sm:$0xf]
        %v914 = vld [vmem:[%s900 + $0x34] sm:$0xf]
        %v915 = vld [vmem:[%s900 + $0x38] sm:$0xf]
        %v916 = vld [vmem:[%s900 + $0x3c] sm:$0xf]
        %s917 = scalar_lea.vmem %s6, %s897
        %v918 = vld [vmem:[%s917] sm:$0x1]
        %v920 = vlaneseq
        %v921 = vshrl.u32 %v920, 7
        %v922 = vsub.s32 0, %v921
        %v923 = vrot.slane %v918, %v922
        %v941 = vunpack.c.l.b16 %v901
        %v942 = vunpack.c.l.b16 %v902
        %v943 = vunpack.c.l.b16 %v903
        %v944 = vunpack.c.l.b16 %v904
        %v945 = vunpack.c.l.b16 %v905
        %v946 = vunpack.c.l.b16 %v906
        %v947 = vunpack.c.l.b16 %v907
        %v948 = vunpack.c.l.b16 %v908
        %v949 = vunpack.c.l.b16 %v909
        %v950 = vunpack.c.l.b16 %v910
        %v951 = vunpack.c.l.b16 %v911
        %v952 = vunpack.c.l.b16 %v912
        %v953 = vunpack.c.l.b16 %v913
        %v954 = vunpack.c.l.b16 %v914
        %v955 = vunpack.c.l.b16 %v915
        %v956 = vunpack.c.l.b16 %v916
        %v957 = vpack.c.b16 %v942, %v941
        %v958 = vpack.c.b16 %v944, %v943
        %v959 = vpack.c.b16 %v946, %v945
        %v960 = vpack.c.b16 %v948, %v947
        %v961 = vpack.c.b16 %v950, %v949
        %v962 = vpack.c.b16 %v952, %v951
        %v963 = vpack.c.b16 %v954, %v953
        %v964 = vpack.c.b16 %v956, %v955
        %973 = vmatprep.subr.bf16.mxu0 0
        %974 = vmatpush1.bf16.msra.mxu0 %v957
        %975 = vmatprep.subr.bf16.mxu0 0
        %976 = vmatpush1.bf16.msra.mxu0 %v958
        %977 = vmatprep.subr.bf16.mxu0 0
        %978 = vmatpush1.bf16.msra.mxu0 %v959
        %979 = vmatprep.subr.bf16.mxu0 0
        %980 = vmatpush1.bf16.msra.mxu0 %v960
        %981 = vmatprep.subr.bf16.mxu0 0
        %982 = vmatpush1.bf16.msra.mxu0 %v961
        %983 = vmatprep.subr.bf16.mxu0 0
        %984 = vmatpush1.bf16.msra.mxu0 %v962
        %985 = vmatprep.subr.bf16.mxu0 0
        %986 = vmatpush1.bf16.msra.mxu0 %v963
        %987 = vmatprep.subr.bf16.mxu0 0
        %988 = vmatpush1.bf16.msra.mxu0 %v964
        %989 = vmatprep.subr.bf16.mxu0 0
        %990 = vmatpush1.bf16.msra.mxu0 0
        %991 = vmatprep.subr.bf16.mxu0 0
        %992 = vmatpush1.bf16.msra.mxu0 0
        %993 = vmatprep.subr.bf16.mxu0 0
        %994 = vmatpush1.bf16.msra.mxu0 0
        %995 = vmatprep.subr.bf16.mxu0 0
        %996 = vmatpush1.bf16.msra.mxu0 0
        %997 = vmatprep.subr.bf16.mxu0 0
        %998 = vmatpush1.bf16.msra.mxu0 0
        %999 = vmatprep.subr.bf16.mxu0 0
        %1000 = vmatpush1.bf16.msra.mxu0 0
        %1001 = vmatprep.subr.bf16.mxu0 0
        %1002 = vmatpush1.bf16.msra.mxu0 0
        %1003 = vmatprep.subr.bf16.mxu0 0
        %1004 = vmatpush1.bf16.msra.mxu0 0
        %1005 = vmatprep.mubr.bf16.mxu0 0
        %1006 = vmatmul.mubr.bf16.gmra.mrb[0].mxu0 %v895
        %v1007 = vpop.f32.mrb[0].mxu0
        %v1008 = vadd.f32 %v923, %v1007
        %v1009 = vpop.f32.mrb[0].mxu0
        %v1010 = vpop.f32.mrb[0].mxu0
        %v1011 = vadd.f32 %v923, %v1010
        %v1012 = vpop.f32.mrb[0].mxu0
        %1013 = vmatprep.mubr.bf16.mxu0 0
        %1014 = vmatmul.mubr.bf16.gmra.mrb[0].mxu0 %v896
        %v1015 = vpop.f32.mrb[0].mxu0
        %v1016 = vadd.f32 %v923, %v1015
        %v1017 = vpop.f32.mrb[0].mxu0
        %v1018 = vpop.f32.mrb[0].mxu0
        %v1019 = vadd.f32 %v923, %v1018
        %v1020 = vpop.f32.mrb[0].mxu0
        %1021 = vdwg.mxu0
        %v1022 = vtanh.pop %v1008
        %v1023 = vtanh.pop %v1011
        %v1024 = vtanh.pop %v1016
        %v1025 = vtanh.pop %v1019
        %v1026 = vpack.c.bf16 %v1023, %v1022
        %v1027 = vpack.c.bf16 %v1025, %v1024
        %s1028 = smul.u32 %s486, 32
        %s1029 = smul.addr %s1028, 4
        %s1030 = scalar_lea.vmem [#allocation12], %s1029
        %v1031 = vld [vmem:[%s1030] sm:$0xff]
        %v1032 = vld [vmem:[%s1030 + $0x8] sm:$0xff]
        %v1033 = vld [vmem:[%s1030 + $0x10] sm:$0xff]
        %v1034 = vld [vmem:[%s1030 + $0x18] sm:$0xff]
        %v1035 = vld [vmem:[%s1030 + $0x20] sm:$0xff]
        %v1036 = vld [vmem:[%s1030 + $0x28] sm:$0xff]
        %v1037 = vld [vmem:[%s1030 + $0x30] sm:$0xff]
        %v1038 = vld [vmem:[%s1030 + $0x38] sm:$0xff]
        %v1039 = vld [vmem:[%s1030 + $0x40] sm:$0xff]
        %v1040 = vld [vmem:[%s1030 + $0x48] sm:$0xff]
        %v1041 = vld [vmem:[%s1030 + $0x50] sm:$0xff]
        %v1042 = vld [vmem:[%s1030 + $0x58] sm:$0xff]
        %v1043 = vld [vmem:[%s1030 + $0x60] sm:$0xff]
        %v1044 = vld [vmem:[%s1030 + $0x68] sm:$0xff]
        %v1045 = vld [vmem:[%s1030 + $0x70] sm:$0xff]
        %v1046 = vld [vmem:[%s1030 + $0x78] sm:$0xff]
        %s1047 = scalar_lea.vmem %s8, %s766
        %v1048 = vld [vmem:[%s1047] sm:$0x3]
        %v1050 = vlaneseq
        %v1051 = vshrl.u32 %v1050, 7
        %v1052 = vsub.s32 0, %v1051
        %v1053 = vrot.slane %v1048, %v1052
        %v1054 = vlaneseq
        %v1055 = vshrl.u32 %v1054, 7
        %v1056 = vsub.s32 1, %v1055
        %v1057 = vrot.slane %v1048, %v1056
        %v1076 = vunpack.c.l.b16 %v1031
        %v1077 = vunpack.c.h.b16 %v1031
        %v1078 = vunpack.c.l.b16 %v1032
        %v1079 = vunpack.c.h.b16 %v1032
        %v1080 = vunpack.c.l.b16 %v1033
        %v1081 = vunpack.c.h.b16 %v1033
        %v1082 = vunpack.c.l.b16 %v1034
        %v1083 = vunpack.c.h.b16 %v1034
        %v1084 = vunpack.c.l.b16 %v1035
        %v1085 = vunpack.c.h.b16 %v1035
        %v1086 = vunpack.c.l.b16 %v1036
        %v1087 = vunpack.c.h.b16 %v1036
        %v1088 = vunpack.c.l.b16 %v1037
        %v1089 = vunpack.c.h.b16 %v1037
        %v1090 = vunpack.c.l.b16 %v1038
        %v1091 = vunpack.c.h.b16 %v1038
        %v1092 = vunpack.c.l.b16 %v1039
        %v1093 = vunpack.c.h.b16 %v1039
        %v1094 = vunpack.c.l.b16 %v1040
        %v1095 = vunpack.c.h.b16 %v1040
        %v1096 = vunpack.c.l.b16 %v1041
        %v1097 = vunpack.c.h.b16 %v1041
        %v1098 = vunpack.c.l.b16 %v1042
        %v1099 = vunpack.c.h.b16 %v1042
        %v1100 = vunpack.c.l.b16 %v1043
        %v1101 = vunpack.c.h.b16 %v1043
        %v1102 = vunpack.c.l.b16 %v1044
        %v1103 = vunpack.c.h.b16 %v1044
        %v1104 = vunpack.c.l.b16 %v1045
        %v1105 = vunpack.c.h.b16 %v1045
        %v1106 = vunpack.c.l.b16 %v1046
        %v1107 = vunpack.c.h.b16 %v1046
        %v1108 = vpack.c.b16 %v1078, %v1076
        %v1109 = vpack.c.b16 %v1079, %v1077
        %v1110 = vpack.c.b16 %v1082, %v1080
        %v1111 = vpack.c.b16 %v1083, %v1081
        %v1112 = vpack.c.b16 %v1086, %v1084
        %v1113 = vpack.c.b16 %v1087, %v1085
        %v1114 = vpack.c.b16 %v1090, %v1088
        %v1115 = vpack.c.b16 %v1091, %v1089
        %v1116 = vpack.c.b16 %v1094, %v1092
        %v1117 = vpack.c.b16 %v1095, %v1093
        %v1118 = vpack.c.b16 %v1098, %v1096
        %v1119 = vpack.c.b16 %v1099, %v1097
        %v1120 = vpack.c.b16 %v1102, %v1100
        %v1121 = vpack.c.b16 %v1103, %v1101
        %v1122 = vpack.c.b16 %v1106, %v1104
        %v1123 = vpack.c.b16 %v1107, %v1105
        %1140 = vmatprep.subr.bf16.mxu0 %v1109
        %1141 = vmatpush1.bf16.msra.mxu0 %v1108
        %1142 = vmatprep.subr.bf16.mxu0 %v1111
        %1143 = vmatpush1.bf16.msra.mxu0 %v1110
        %1144 = vmatprep.subr.bf16.mxu0 %v1113
        %1145 = vmatpush1.bf16.msra.mxu0 %v1112
        %1146 = vmatprep.subr.bf16.mxu0 %v1115
        %1147 = vmatpush1.bf16.msra.mxu0 %v1114
        %1148 = vmatprep.subr.bf16.mxu0 %v1117
        %1149 = vmatpush1.bf16.msra.mxu0 %v1116
        %1150 = vmatprep.subr.bf16.mxu0 %v1119
        %1151 = vmatpush1.bf16.msra.mxu0 %v1118
        %1152 = vmatprep.subr.bf16.mxu0 %v1121
        %1153 = vmatpush1.bf16.msra.mxu0 %v1120
        %1154 = vmatprep.subr.bf16.mxu0 %v1123
        %1155 = vmatpush1.bf16.msra.mxu0 %v1122
        %1156 = vmatprep.subr.bf16.mxu0 0
        %1157 = vmatpush1.bf16.msra.mxu0 0
        %1158 = vmatprep.subr.bf16.mxu0 0
        %1159 = vmatpush1.bf16.msra.mxu0 0
        %1160 = vmatprep.subr.bf16.mxu0 0
        %1161 = vmatpush1.bf16.msra.mxu0 0
        %1162 = vmatprep.subr.bf16.mxu0 0
        %1163 = vmatpush1.bf16.msra.mxu0 0
        %1164 = vmatprep.subr.bf16.mxu0 0
        %1165 = vmatpush1.bf16.msra.mxu0 0
        %1166 = vmatprep.subr.bf16.mxu0 0
        %1167 = vmatpush1.bf16.msra.mxu0 0
        %1168 = vmatprep.subr.bf16.mxu0 0
        %1169 = vmatpush1.bf16.msra.mxu0 0
        %1170 = vmatprep.subr.bf16.mxu0 0
        %1171 = vmatpush1.bf16.msra.mxu0 0
        %1172 = vmatprep.mubr.bf16.mxu0 0
        %1173 = vmatmul.mubr.bf16.gmra.mrb[0].mxu0 %v1026
        %v1174 = vpop.f32.mrb[0].mxu0
        %v1175 = vadd.f32 %v1053, %v1174
        %v1176 = vpop.f32.mrb[0].mxu0
        %v1177 = vadd.f32 %v1057, %v1176
        %v1178 = vpop.f32.mrb[0].mxu0
        %v1179 = vadd.f32 %v1053, %v1178
        %v1180 = vpop.f32.mrb[0].mxu0
        %v1181 = vadd.f32 %v1057, %v1180
        %1182 = vmatprep.mubr.bf16.mxu0 0
        %1183 = vmatmul.mubr.bf16.gmra.mrb[0].mxu0 %v1027
        %v1184 = vpop.f32.mrb[0].mxu0
        %v1185 = vadd.f32 %v1053, %v1184
        %v1186 = vpop.f32.mrb[0].mxu0
        %v1187 = vadd.f32 %v1057, %v1186
        %v1188 = vpop.f32.mrb[0].mxu0
        %v1189 = vadd.f32 %v1053, %v1188
        %v1190 = vpop.f32.mrb[0].mxu0
        %v1191 = vadd.f32 %v1057, %v1190
        %1192 = vdwg.mxu0
        %v1193 = vld [vmem:[%s423] sm:$0xff]
        %v1194 = vld [vmem:[%s423 + $0x8] sm:$0xff]
        %v1195 = vld [vmem:[%s423 + $0x10] sm:$0xff]
        %v1196 = vld [vmem:[%s423 + $0x18] sm:$0xff]
        %v1197 = vmul.f32 %v1177, 0.5
        %v1198 = vmul.f32 %v1181, 0.5
        %v1199 = vmul.f32 %v1187, 0.5
        %v1200 = vmul.f32 %v1191, 0.5
        %v1201 = vmul.f32 %v1197, 1.442695
        %v1202 = vpow.pop %v1201
        %v1203 = vmul.f32 %v1198, 1.442695
        %v1204 = vpow.pop %v1203
        %v1205 = vmul.f32 %v1199, 1.442695
        %v1206 = vpow.pop %v1205
        %v1207 = vmul.f32 %v1200, 1.442695
        %v1208 = vpow.pop %v1207
        %v1209 = vmul.f32 %v1193, %v1202
        %v1210 = vmul.f32 %v1194, %v1204
        %v1211 = vmul.f32 %v1195, %v1206
        %v1212 = vmul.f32 %v1196, %v1208
        %v1213 = vadd.f32 %v1175, %v1209
        %v1214 = vadd.f32 %v1179, %v1210
        %v1215 = vadd.f32 %v1185, %v1211
        %v1216 = vadd.f32 %v1189, %v1212
        %1217 = vst [vmem:[#allocation2] sm:$0xff] %v1213
        %1218 = vst [vmem:[#allocation2 + $0x8] sm:$0xff] %v1214
        %1219 = vst [vmem:[#allocation2 + $0x10] sm:$0xff] %v1215
        %1220 = vst [vmem:[#allocation2 + $0x18] sm:$0xff] %v1216
        %1221 = vst [vmem:[%s478] sm:$0xff] %v1175
        %1222 = vst [vmem:[%s478 + $0x18] sm:$0xff] %v1179
        %1223 = vst [vmem:[%s478 + $0x30] sm:$0xff] %v1185
        %1224 = vst [vmem:[%s478 + $0x48] sm:$0xff] %v1189
        %1225 = vst [vmem:[%s478 + $0x8] sm:$0xff] %v1177
        %1226 = vst [vmem:[%s478 + $0x20] sm:$0xff] %v1181
        %1227 = vst [vmem:[%s478 + $0x38] sm:$0xff] %v1187
        %1228 = vst [vmem:[%s478 + $0x50] sm:$0xff] %v1191
        %1229 = vst [vmem:[%s478 + $0x10] sm:$0xff] %v1213
        %1230 = vst [vmem:[%s478 + $0x28] sm:$0xff] %v1214
        %1231 = vst [vmem:[%s478 + $0x40] sm:$0xff] %v1215
        %1232 = vst [vmem:[%s478 + $0x58] sm:$0xff] %v1216
        %s1233 = sand.u32 %s262, 1
        %s1234 = scalar_lea.sflag [#allocation5], %s1233
        %s1235 = sand.u32 %s262, 1
        %s1236 = smul.addr %s1235, 96
        %s1237 = scalar_lea.vmem [#allocation14], %s1236
        // Predicated region
        $region85: #{tpu_custom_call.1} parent=55 // pred_check
          %p1238 = pneg %p272
        $region86: #{tpu_custom_call.1} parent=55 // pred_check_branch
          %1240 = sbr.rel (%p1238) target = $region88
        $region87: #{tpu_custom_call.1} parent=55 // pred_region
          %s1241 = ssub.s32 1, %s36
          %s1242 = smul.u32 4, %s35
          %s1244 = ssub.s32 1536, 1536
          %1245 = vsyncadd %s1234, %s1244
          %s1246 = smul.addr %s1242, 3
          %s1247 = smul.addr %s1241, 12
          %s1248 = sadd.s32 %s1246, %s1247
          %s1249 = smul.addr %s1248, 128
          %s1250 = scalar_lea.hbm %s9, %s1249
          %s1251 = sshll.u32 %s1237, 4
          %s1252 = int_to_ptr.vmem [resolvable:$true] %s1251
          %1257 = dma.vmem_to_hbm [thread:$0]  %s1252, 1536, %s1250, %s1234, 384, 384, 24
        $region88: #{tpu_custom_call.1} parent=55 // pred_fallthru
          _
      $region56: #{tpu_custom_call.1} parent=5 // pred_fallthru
        _
      %p1258 = scmp.le.s32.totalorder 2, %s26
      // Predicated region
      $region89: #{tpu_custom_call.1} parent=5 // pred_check
        %p1259 = pneg %p1258
      $region90: #{tpu_custom_call.1} parent=5 // pred_check_branch
        %1261 = sbr.rel (%p1259) target = $region92
      $region91: #{tpu_custom_call.1} parent=5 // pred_region
        %s1262 = ssub.s32 %s26, 2
        // Predicated region
        $region93: #{tpu_custom_call.1} parent=91 // pred_check
          %p1263 = pneg %p278
        $region94: #{tpu_custom_call.1} parent=91 // pred_check_branch
          %1265 = sbr.rel (%p1263) target = $region96
        $region95: #{tpu_custom_call.1} parent=91 // pred_region
          %s1266 = sand.u32 %s263, 1
          %s1267 = scalar_lea.sflag [#allocation5], %s1266
          %s1268 = sand.u32 %s263, 1
          %s1269 = smul.addr %s1268, 96
          %s1270 = scalar_lea.vmem [#allocation14], %s1269
          %1271 = dma.done %s1267, 1536
        $region96: #{tpu_custom_call.1} parent=91 // pred_fallthru
          _
      $region92: #{tpu_custom_call.1} parent=5 // pred_fallthru
        _
    $region6: #{tpu_custom_call.1} parent=1 // loop_footer
      %s30 = sadd.s32 1, %s26
    $region7: #{tpu_custom_call.1} parent=1 // loop_footer_branch
      %25 = sbr.rel target = $region3
    $region8: #{tpu_custom_call.1} parent=1 // loop_exit
      _
    %1272 = vsyncpa [#allocation4], 1
    %s1273 = scalar_lea.sflag [#allocation4], 1
    %1274 = vsyncpa %s1273, 1
    %1275 = vsyncpa [#allocation7], 1
    %s1276 = scalar_lea.sflag [#allocation7], 1
    %1277 = vsyncpa %s1276, 1
    %1278 = vsyncpa [#allocation10], 1
    %1279 = vsyncpa [#allocation13], 1
    %1280 = vsyncpa [#allocation5], 1
    %s1281 = scalar_lea.sflag [#allocation5], 1
    %1282 = vsyncpa %s1281, 1

</llo_original>
